<compile_context>
chip_gen: v5e
topology: v5e:2x2
jax: 0.10.0
libtpu: 0.0.40
codegen_flags: <defaults>
</compile_context>

<pallas_src>
import functools

import jax
import jax.numpy as jnp
from jax import lax
from jax.experimental import pallas as pl
from jax.experimental.pallas import tpu as pltpu


def _round_up(n, m):
    return ((n + m - 1) // m) * m


def _convgru_kernel(Bblk, H, W, Cin, Chid, K, P, TOP, R, D1, D2,
                    x_ref, h_ref, w1_ref, w2_ref, out_ref,
                    fx_ref, fh_ref, s1_ref):
    # x_ref:   (Bblk, Cin,  N)  flattened NCHW input block,  N = H*W
    # h_ref:   (Bblk, Chid, N)  flattened previous hidden state block
    # w1_ref:  (3*Chid, D1)     fused [z | r | o_x] weights + bias column
    # w2_ref:  (Chid,  D2)      o-gate weights for the (h*r) source
    # out_ref: (Bblk, Chid, N)  new hidden state block
    # fx_ref:  VMEM (Cin,  R)   x with zero vertical halo (data at [TOP,TOP+N))
    # fh_ref:  VMEM (Chid, R)   h (later reused in place for h*r)
    # s1_ref:  VMEM (D1, N)     im2col buffer [h taps | x taps | ones]
    N = H * W
    BOT = R - TOP - N

    # ---- per-grid-step setup (shared by the Bblk batch elements) ----------
    # Halo lanes + ones row.  Data lanes / tap rows are fully rewritten for
    # every batch element, so nothing leaks between grid steps even though
    # the scratch persists.  (Not guarded by pl.when(program_id==0): scratch
    # is per-core and step 0 only runs on one core under megacore sharding.)
    if TOP > 0:
        fx_ref[:, pl.ds(0, TOP)] = jnp.zeros((Cin, TOP), jnp.float32)
        fh_ref[:, pl.ds(0, TOP)] = jnp.zeros((Chid, TOP), jnp.float32)
    if BOT > 0:
        fx_ref[:, pl.ds(TOP + N, BOT)] = jnp.zeros((Cin, BOT), jnp.float32)
        fh_ref[:, pl.ds(TOP + N, BOT)] = jnp.zeros((Chid, BOT), jnp.float32)
    s1_ref[pl.ds(D1 - 1, 1), :] = jnp.ones((1, N), jnp.float32)

    # dx column-validity masks, generated in-kernel (no HBM mask input).
    cols = lax.broadcasted_iota(jnp.int32, (1, N), 1) % W
    col_ok = [
        None if dx == P else
        ((cols >= (P - dx)) & (cols < (W + P - dx))).astype(jnp.float32)
        for dx in range(K)
    ]

    w1 = w1_ref[...]                       # (3*Chid, D1)  lane-dense
    w2 = w2_ref[...]                       # (Chid,  D2)

    def build_taps(src_ref, row0, C):
        # Scatter the K*K shifted (and column-masked) copies of the padded
        # source into im2col rows [row0, row0 + K*K*C).  All offsets static.
        srcv = src_ref[...]                # (C, R) value, lane-dense
        for dy in range(K):
            for dx in range(K):
                t = dy * K + dx
                start = TOP + (dy - P) * W + (dx - P)
                sl = srcv[:, start:start + N]              # (C, N)
                if col_ok[dx] is not None:
                    sl = sl * col_ok[dx]                   # mask the source
                s1_ref[pl.ds(row0 + t * C, C), :] = sl

    # ---- per-batch-element work (static unrolled loop, Bblk is small) -----
    for i in range(Bblk):
        x = x_ref[i]                       # (Cin,  N)
        h = h_ref[i]                       # (Chid, N)
        fx_ref[:, pl.ds(TOP, N)] = x       # TOP is 128-aligned -> dense store
        fh_ref[:, pl.ds(TOP, N)] = h

        # im2col: h taps first (sublane-aligned rows when Chid % 8 == 0).
        build_taps(fh_ref, 0, Chid)
        build_taps(fx_ref, D2, Cin)

        # One wide MXU matmul: [z | r | o_x] pre-activations (+ bias).
        g = jnp.dot(w1, s1_ref[...], preferred_element_type=jnp.float32)
        z = jax.nn.sigmoid(g[0:Chid])
        r = jax.nn.sigmoid(g[Chid:2 * Chid])

        # Candidate gate: conv over (h * r).  All reads of h / its taps are
        # done, so fh's data lanes and the h-tap rows of s1 are reused.
        fh_ref[:, pl.ds(TOP, N)] = h * r
        build_taps(fh_ref, 0, Chid)
        ghr = jnp.dot(w2, s1_ref[pl.ds(0, D2), :],
                      preferred_element_type=jnp.float32)
        o = jnp.tanh(g[2 * Chid:3 * Chid] + ghr)

        out_ref[i] = h * (1.0 - z) + o * z          # (Chid, N), dense store


def convgru_cell_pallas(x, h, params, kernel_size, batch_block=None):
    """x: (B, Cin, H, W), h: (B, Chid, H, W)  ->  new hidden (B, Chid, H, W).

    Note: the weight fusion below is cheap but should be hoisted outside any
    per-timestep loop (e.g. lax.scan) when the cell is applied repeatedly.
    """
    B, Cin, H, W = x.shape
    Chid = h.shape[1]
    K = kernel_size
    # Symmetric zero padding == PyTorch padding=K//2 only for odd K.
    assert K % 2 == 1, "odd kernel_size required (as used by the module)"
    P = K // 2
    N = H * W
    KK = K * K
    D2 = KK * Chid                 # h-tap rows (and second-matmul contraction)
    D1 = D2 + KK * Cin + 1         # + x-tap rows + ones (bias) row

    (wzx, wzh, bz, wrx, wrh, br, wox, woh, bo) = params

    def flat(w):                   # (K, K, Cin, Cout) -> (Cout, K*K*Cin)
        co = w.shape[-1]
        return jnp.transpose(w, (3, 0, 1, 2)).reshape(co, -1)

    # Fused, tap-minor (lane-dense) weight matrices; bias folded as a column.
    # For best sublane alignment of the gate slices keep Chid % 8 == 0.
    zeros_oh = jnp.zeros((Chid, D2), jnp.float32)
    w1 = jnp.concatenate([
        jnp.concatenate([flat(wzh), flat(wzx), bz.reshape(Chid, 1)], axis=1),
        jnp.concatenate([flat(wrh), flat(wrx), br.reshape(Chid, 1)], axis=1),
        jnp.concatenate([zeros_oh,  flat(wox), bo.reshape(Chid, 1)], axis=1),
    ], axis=0).astype(jnp.float32)                         # (3*Chid, D1)
    w2 = flat(woh).astype(jnp.float32)                     # (Chid, D2)

    # Flatten spatial dims: pure metadata reshape on NCHW, no copy, no pad.
    x2 = x.reshape(B, Cin, N)
    h2 = h.reshape(B, Chid, N)

    if batch_block is None:
        # Default: the largest divisor of B that still leaves >=2 grid steps
        # (both v7x TensorCores get work).  On single-TC v5e/v6e pass
        # batch_block=B to fold all batch elements into one grid step.
        batch_block = 1
        for d in range(B, 0, -1):
            if B % d == 0 and B // d >= min(2, B):
                batch_block = d
                break
    assert B % batch_block == 0, "batch_block must divide the batch"

    # Scratch row layout: [zero halo | data (N lanes) | zero halo].
    TOP = _round_up(P * W + P, 128)                        # 128-aligned data
    R = _round_up(TOP + N + P * W + P, 128)

    kernel = functools.partial(_convgru_kernel, batch_block, H, W, Cin, Chid,
                               K, P, TOP, R, D1, D2)

    out = pl.pallas_call(
        kernel,
        out_shape=jax.ShapeDtypeStruct((B, Chid, N), jnp.float32),
        grid_spec=pltpu.PrefetchScalarGridSpec(
            num_scalar_prefetch=0,
            grid=(B // batch_block,),
            in_specs=[
                pl.BlockSpec((batch_block, Cin, N), lambda b: (b, 0, 0)),
                pl.BlockSpec((batch_block, Chid, N), lambda b: (b, 0, 0)),
                # Fused weights: tiny, constant, lane-dense blocks.
                pl.BlockSpec(w1.shape, lambda b: (0, 0)),
                pl.BlockSpec(w2.shape, lambda b: (0, 0)),
            ],
            out_specs=pl.BlockSpec((batch_block, Chid, N),
                                   lambda b: (b, 0, 0)),
            scratch_shapes=[
                pltpu.VMEM((Cin, R), jnp.float32),
                pltpu.VMEM((Chid, R), jnp.float32),
                pltpu.VMEM((D1, N), jnp.float32),
            ],
        ),
        compiler_params=pltpu.CompilerParams(
            dimension_semantics=("parallel",)),
    )(x2, h2, w1, w2)

    # Metadata-only reshape back to NCHW.
    # Note: for large images / hidden dims (esp. v7x's 64 MiB VMEM) add a
    # spatial grid axis with halo over-fetch and set vmem_limit_bytes
    # explicitly; unnecessary at these sizes.
    return out.reshape(B, Chid, H, W)


def convgru_cell_ref(x, h, params, kernel_size):
    """Pure-JAX reference matching the PyTorch forward (NCHW)."""
    (wzx, wzh, bz, wrx, wrh, br, wox, woh, bo) = params
    dn = ("NCHW", "HWIO", "NCHW")

    def conv(inp, w, b):
        y = lax.conv_general_dilated(inp, w, (1, 1), "SAME",
                                     dimension_numbers=dn)
        return y + b.reshape(1, -1, 1, 1)

    wz = jnp.concatenate([wzx, wzh], axis=2)
    wr = jnp.concatenate([wrx, wrh], axis=2)
    wo = jnp.concatenate([wox, woh], axis=2)

    stacked = jnp.concatenate([x, h], axis=1)
    z = jax.nn.sigmoid(conv(stacked, wz, bz))
    r = jax.nn.sigmoid(conv(stacked, wr, br))
    o = jnp.tanh(conv(jnp.concatenate([x, h * r], axis=1), wo, bo))
    return h * (1.0 - z) + o * z


def init_params(key, Cin, Chid, K):
    ks = jax.random.split(key, 9)
    scale = 0.1

    def w(k, cin):
        return (scale * jax.random.normal(k, (K, K, cin, Chid))).astype(
            jnp.float32)

    wzx, wzh = w(ks[0], Cin), w(ks[1], Chid)
    wrx, wrh = w(ks[2], Cin), w(ks[3], Chid)
    wox, woh = w(ks[4], Cin), w(ks[5], Chid)
    bz = (scale * jax.random.normal(ks[6], (1, Chid))).astype(jnp.float32)
    br = (scale * jax.random.normal(ks[7], (1, Chid))).astype(jnp.float32)
    bo = (scale * jax.random.normal(ks[8], (1, Chid))).astype(jnp.float32)
    return (wzx, wzh, bz, wrx, wrh, br, wox, woh, bo)


if __name__ == "__main__":
    B, H, W = 2, 16, 16
    Cin, Chid, K = 4, 8, 3

    key = jax.random.PRNGKey(0)
    kx, kh, kp = jax.random.split(key, 3)
    x = jax.random.normal(kx, (B, Cin, H, W), dtype=jnp.float32)
    h = jax.random.normal(kh, (B, Chid, H, W), dtype=jnp.float32)
    params = init_params(kp, Cin, Chid, K)

    out = jax.block_until_ready(convgru_cell_pallas(x, h, params, K))
    ref = jax.block_until_ready(convgru_cell_ref(x, h, params, K))

    assert out.shape == (B, Chid, H, W)
    max_err = float(jnp.max(jnp.abs(out - ref)))
    assert jnp.allclose(out, ref, rtol=1e-4, atol=1e-4), max_err

    print("KERNEL_OK")
</pallas_src>

<mosaic_0001>
module attributes {stable_mosaic.version = 11 : i64} {
  func.func @_convgru_kernel(%arg0: i32, %arg1: memref<1x4x256xf32, #tpu.memory_space<vmem>>, %arg2: memref<1x8x256xf32, #tpu.memory_space<vmem>>, %arg3: memref<24x109xf32, #tpu.memory_space<vmem>>, %arg4: memref<8x72xf32, #tpu.memory_space<vmem>>, %arg5: memref<1x8x256xf32, #tpu.memory_space<vmem>>, %arg6: memref<4x512xf32, #tpu.memory_space<vmem>>, %arg7: memref<8x512xf32, #tpu.memory_space<vmem>>, %arg8: memref<109x256xf32, #tpu.memory_space<vmem>>) attributes {dimension_semantics = [#tpu.dimension_semantics<parallel>], iteration_bounds = array<i64: 2>, scalar_prefetch = 0 : i64, scratch_operands = 3 : i64, tpu.core_type = #tpu.core_type<tc>, window_params = [{transform_indices = @transform_0, window_bounds = array<i64: 1, 4, 256>}, {transform_indices = @transform_1, window_bounds = array<i64: 1, 8, 256>}, {pipeline_mode = #tpu.pipeline_mode<synchronous>, transform_indices = @transform_2, window_bounds = array<i64: 24, 109>}, {pipeline_mode = #tpu.pipeline_mode<synchronous>, transform_indices = @transform_3, window_bounds = array<i64: 8, 72>}, {transform_indices = @transform_4, window_bounds = array<i64: 1, 8, 256>}]} {
    %cst = arith.constant 0.000000e+00 : f32
    %0 = vector.broadcast %cst : f32 to vector<4x128xf32>
    %c0 = arith.constant 0 : index
    %c0_0 = arith.constant 0 : index
    %1 = vector.load %arg6[%c0, %c0_0] : memref<4x512xf32, #tpu.memory_space<vmem>>, vector<4x128xf32>
    tpu.vector_store %arg6[%c0, %c0_0], %0 {strides = array<i32>} : memref<4x512xf32, #tpu.memory_space<vmem>>, vector<4x128xf32>,
    %cst_1 = arith.constant 0.000000e+00 : f32
    %2 = vector.broadcast %cst_1 : f32 to vector<8x128xf32>
    %c0_2 = arith.constant 0 : index
    %c0_3 = arith.constant 0 : index
    %3 = vector.load %arg7[%c0_2, %c0_3] : memref<8x512xf32, #tpu.memory_space<vmem>>, vector<8x128xf32>
    tpu.vector_store %arg7[%c0_2, %c0_3], %2 {strides = array<i32>} : memref<8x512xf32, #tpu.memory_space<vmem>>, vector<8x128xf32>,
    %cst_4 = arith.constant 0.000000e+00 : f32
    %4 = vector.broadcast %cst_4 : f32 to vector<4x128xf32>
    %c0_5 = arith.constant 0 : index
    %c384 = arith.constant 384 : index
    %5 = vector.load %arg6[%c0_5, %c384] : memref<4x512xf32, #tpu.memory_space<vmem>>, vector<4x128xf32>
    tpu.vector_store %arg6[%c0_5, %c384], %4 {strides = array<i32>} : memref<4x512xf32, #tpu.memory_space<vmem>>, vector<4x128xf32>,
    %cst_6 = arith.constant 0.000000e+00 : f32
    %6 = vector.broadcast %cst_6 : f32 to vector<8x128xf32>
    %c0_7 = arith.constant 0 : index
    %c384_8 = arith.constant 384 : index
    %7 = vector.load %arg7[%c0_7, %c384_8] : memref<8x512xf32, #tpu.memory_space<vmem>>, vector<8x128xf32>
    tpu.vector_store %arg7[%c0_7, %c384_8], %6 {strides = array<i32>} : memref<8x512xf32, #tpu.memory_space<vmem>>, vector<8x128xf32>,
    %cst_9 = arith.constant 1.000000e+00 : f32
    %8 = vector.broadcast %cst_9 : f32 to vector<1x256xf32>
    %c108 = arith.constant 108 : index
    %c0_10 = arith.constant 0 : index
    %9 = vector.load %arg8[%c108, %c0_10] : memref<109x256xf32, #tpu.memory_space<vmem>>, vector<1x256xf32>
    tpu.vector_store %arg8[%c108, %c0_10], %8 {strides = array<i32>} : memref<109x256xf32, #tpu.memory_space<vmem>>, vector<1x256xf32>,
    %10 = tpu.iota {dimensions = array<i32: 1>} : vector<1x256xi32>
    %c16_i32 = arith.constant 16 : i32
    %c0_i32 = arith.constant 0 : i32
    %11 = arith.cmpi eq, %c16_i32, %c0_i32 : i32
    %c1_i32 = arith.constant 1 : i32
    %12 = arith.select %11, %c1_i32, %c16_i32 : i32
    %13 = vector.broadcast %12 : i32 to vector<1x256xi32>
    %14 = arith.remsi %10, %13 : vector<1x256xi32>
    %c0_i32_11 = arith.constant 0 : i32
    %15 = vector.broadcast %c0_i32_11 : i32 to vector<1x256xi32>
    %16 = arith.cmpi ne, %14, %15 : vector<1x256xi32>
    %c0_i32_12 = arith.constant 0 : i32
    %17 = vector.broadcast %c0_i32_12 : i32 to vector<1x256xi32>
    %18 = arith.cmpi slt, %14, %17 : vector<1x256xi32>
    %c0_i32_13 = arith.constant 0 : i32
    %19 = arith.cmpi slt, %12, %c0_i32_13 : i32
    %20 = vector.broadcast %19 : i1 to vector<1x256xi1>
    %21 = vector.broadcast %20 : vector<1x256xi1> to vector<1x256xi1>
    %22 = arith.xori %18, %21 : vector<1x256xi1>
    %23 = arith.andi %22, %16 : vector<1x256xi1>
    %24 = vector.broadcast %12 : i32 to vector<1x256xi32>
    %25 = arith.addi %14, %24 : vector<1x256xi32>
    %26 = arith.select %23, %25, %14 : vector<1x256xi1>, vector<1x256xi32>
    %c1_i32_14 = arith.constant 1 : i32
    %27 = vector.broadcast %c1_i32_14 : i32 to vector<1x256xi32>
    %28 = arith.cmpi sge, %26, %27 : vector<1x256xi32>
    %c17_i32 = arith.constant 17 : i32
    %29 = vector.broadcast %c17_i32 : i32 to vector<1x256xi32>
    %30 = arith.cmpi slt, %26, %29 : vector<1x256xi32>
    %31 = arith.andi %28, %30 : vector<1x256xi1>
    %32 = arith.extui %31 : vector<1x256xi1> to vector<1x256xi32>
    %33 = arith.sitofp %32 : vector<1x256xi32> to vector<1x256xf32>
    %c-1_i32 = arith.constant -1 : i32
    %34 = vector.broadcast %c-1_i32 : i32 to vector<1x256xi32>
    %35 = arith.cmpi sge, %26, %34 : vector<1x256xi32>
    %c15_i32 = arith.constant 15 : i32
    %36 = vector.broadcast %c15_i32 : i32 to vector<1x256xi32>
    %37 = arith.cmpi slt, %26, %36 : vector<1x256xi32>
    %38 = arith.andi %35, %37 : vector<1x256xi1>
    %39 = arith.extui %38 : vector<1x256xi1> to vector<1x256xi32>
    %40 = arith.sitofp %39 : vector<1x256xi32> to vector<1x256xf32>
    %c0_15 = arith.constant 0 : index
    %c0_16 = arith.constant 0 : index
    %41 = vector.load %arg3[%c0_15, %c0_16] : memref<24x109xf32, #tpu.memory_space<vmem>>, vector<24x109xf32>
    %c0_17 = arith.constant 0 : index
    %c0_18 = arith.constant 0 : index
    %42 = vector.load %arg4[%c0_17, %c0_18] : memref<8x72xf32, #tpu.memory_space<vmem>>, vector<8x72xf32>
    %c0_19 = arith.constant 0 : index
    %c0_20 = arith.constant 0 : index
    %c0_21 = arith.constant 0 : index
    %43 = vector.load %arg1[%c0_19, %c0_20, %c0_21] : memref<1x4x256xf32, #tpu.memory_space<vmem>>, vector<1x4x256xf32>
    %44 = vector.shape_cast %43 : vector<1x4x256xf32> to vector<4x256xf32>
    %c0_22 = arith.constant 0 : index
    %c0_23 = arith.constant 0 : index
    %c0_24 = arith.constant 0 : index
    %45 = vector.load %arg2[%c0_22, %c0_23, %c0_24] : memref<1x8x256xf32, #tpu.memory_space<vmem>>, vector<1x8x256xf32>
    %46 = vector.shape_cast %45 : vector<1x8x256xf32> to vector<8x256xf32>
    %c0_25 = arith.constant 0 : index
    %c128 = arith.constant 128 : index
    %47 = vector.load %arg6[%c0_25, %c128] : memref<4x512xf32, #tpu.memory_space<vmem>>, vector<4x256xf32>
    tpu.vector_store %arg6[%c0_25, %c128], %44 {strides = array<i32>} : memref<4x512xf32, #tpu.memory_space<vmem>>, vector<4x256xf32>,
    %c0_26 = arith.constant 0 : index
    %c128_27 = arith.constant 128 : index
    %48 = vector.load %arg7[%c0_26, %c128_27] : memref<8x512xf32, #tpu.memory_space<vmem>>, vector<8x256xf32>
    tpu.vector_store %arg7[%c0_26, %c128_27], %46 {strides = array<i32>} : memref<8x512xf32, #tpu.memory_space<vmem>>, vector<8x256xf32>,
    %c0_28 = arith.constant 0 : index
    %c0_29 = arith.constant 0 : index
    %49 = vector.load %arg7[%c0_28, %c0_29] : memref<8x512xf32, #tpu.memory_space<vmem>>, vector<8x512xf32>
    %50 = vector.extract_strided_slice %49 {offsets = [0, 111], sizes = [8, 256], strides = [1, 1]} : vector<8x512xf32> to vector<8x256xf32>
    %51 = vector.broadcast %33 : vector<1x256xf32> to vector<8x256xf32>
    %52 = arith.mulf %50, %51 : vector<8x256xf32>
    %c0_30 = arith.constant 0 : index
    %c0_31 = arith.constant 0 : index
    %53 = vector.load %arg8[%c0_30, %c0_31] : memref<109x256xf32, #tpu.memory_space<vmem>>, vector<8x256xf32>
    tpu.vector_store %arg8[%c0_30, %c0_31], %52 {strides = array<i32>} : memref<109x256xf32, #tpu.memory_space<vmem>>, vector<8x256xf32>,
    %54 = vector.extract_strided_slice %49 {offsets = [0, 112], sizes = [8, 256], strides = [1, 1]} : vector<8x512xf32> to vector<8x256xf32>
    %c8 = arith.constant 8 : index
    %c0_32 = arith.constant 0 : index
    %55 = vector.load %arg8[%c8, %c0_32] : memref<109x256xf32, #tpu.memory_space<vmem>>, vector<8x256xf32>
    tpu.vector_store %arg8[%c8, %c0_32], %54 {strides = array<i32>} : memref<109x256xf32, #tpu.memory_space<vmem>>, vector<8x256xf32>,
    %56 = vector.extract_strided_slice %49 {offsets = [0, 113], sizes = [8, 256], strides = [1, 1]} : vector<8x512xf32> to vector<8x256xf32>
    %57 = vector.broadcast %40 : vector<1x256xf32> to vector<8x256xf32>
    %58 = arith.mulf %56, %57 : vector<8x256xf32>
    %c16 = arith.constant 16 : index
    %c0_33 = arith.constant 0 : index
    %59 = vector.load %arg8[%c16, %c0_33] : memref<109x256xf32, #tpu.memory_space<vmem>>, vector<8x256xf32>
    tpu.vector_store %arg8[%c16, %c0_33], %58 {strides = array<i32>} : memref<109x256xf32, #tpu.memory_space<vmem>>, vector<8x256xf32>,
    %60 = vector.extract_strided_slice %49 {offsets = [0, 127], sizes = [8, 256], strides = [1, 1]} : vector<8x512xf32> to vector<8x256xf32>
    %61 = vector.broadcast %33 : vector<1x256xf32> to vector<8x256xf32>
    %62 = arith.mulf %60, %61 : vector<8x256xf32>
    %c24 = arith.constant 24 : index
    %c0_34 = arith.constant 0 : index
    %63 = vector.load %arg8[%c24, %c0_34] : memref<109x256xf32, #tpu.memory_space<vmem>>, vector<8x256xf32>
    tpu.vector_store %arg8[%c24, %c0_34], %62 {strides = array<i32>} : memref<109x256xf32, #tpu.memory_space<vmem>>, vector<8x256xf32>,
    %64 = vector.extract_strided_slice %49 {offsets = [0, 128], sizes = [8, 256], strides = [1, 1]} : vector<8x512xf32> to vector<8x256xf32>
    %c32 = arith.constant 32 : index
    %c0_35 = arith.constant 0 : index
    %65 = vector.load %arg8[%c32, %c0_35] : memref<109x256xf32, #tpu.memory_space<vmem>>, vector<8x256xf32>
    tpu.vector_store %arg8[%c32, %c0_35], %64 {strides = array<i32>} : memref<109x256xf32, #tpu.memory_space<vmem>>, vector<8x256xf32>,
    %66 = vector.extract_strided_slice %49 {offsets = [0, 129], sizes = [8, 256], strides = [1, 1]} : vector<8x512xf32> to vector<8x256xf32>
    %67 = vector.broadcast %40 : vector<1x256xf32> to vector<8x256xf32>
    %68 = arith.mulf %66, %67 : vector<8x256xf32>
    %c40 = arith.constant 40 : index
    %c0_36 = arith.constant 0 : index
    %69 = vector.load %arg8[%c40, %c0_36] : memref<109x256xf32, #tpu.memory_space<vmem>>, vector<8x256xf32>
    tpu.vector_store %arg8[%c40, %c0_36], %68 {strides = array<i32>} : memref<109x256xf32, #tpu.memory_space<vmem>>, vector<8x256xf32>,
    %70 = vector.extract_strided_slice %49 {offsets = [0, 143], sizes = [8, 256], strides = [1, 1]} : vector<8x512xf32> to vector<8x256xf32>
    %71 = vector.broadcast %33 : vector<1x256xf32> to vector<8x256xf32>
    %72 = arith.mulf %70, %71 : vector<8x256xf32>
    %c48 = arith.constant 48 : index
    %c0_37 = arith.constant 0 : index
    %73 = vector.load %arg8[%c48, %c0_37] : memref<109x256xf32, #tpu.memory_space<vmem>>, vector<8x256xf32>
    tpu.vector_store %arg8[%c48, %c0_37], %72 {strides = array<i32>} : memref<109x256xf32, #tpu.memory_space<vmem>>, vector<8x256xf32>,
    %74 = vector.extract_strided_slice %49 {offsets = [0, 144], sizes = [8, 256], strides = [1, 1]} : vector<8x512xf32> to vector<8x256xf32>
    %c56 = arith.constant 56 : index
    %c0_38 = arith.constant 0 : index
    %75 = vector.load %arg8[%c56, %c0_38] : memref<109x256xf32, #tpu.memory_space<vmem>>, vector<8x256xf32>
    tpu.vector_store %arg8[%c56, %c0_38], %74 {strides = array<i32>} : memref<109x256xf32, #tpu.memory_space<vmem>>, vector<8x256xf32>,
    %76 = vector.extract_strided_slice %49 {offsets = [0, 145], sizes = [8, 256], strides = [1, 1]} : vector<8x512xf32> to vector<8x256xf32>
    %77 = vector.broadcast %40 : vector<1x256xf32> to vector<8x256xf32>
    %78 = arith.mulf %76, %77 : vector<8x256xf32>
    %c64 = arith.constant 64 : index
    %c0_39 = arith.constant 0 : index
    %79 = vector.load %arg8[%c64, %c0_39] : memref<109x256xf32, #tpu.memory_space<vmem>>, vector<8x256xf32>
    tpu.vector_store %arg8[%c64, %c0_39], %78 {strides = array<i32>} : memref<109x256xf32, #tpu.memory_space<vmem>>, vector<8x256xf32>,
    %c0_40 = arith.constant 0 : index
    %c0_41 = arith.constant 0 : index
    %80 = vector.load %arg6[%c0_40, %c0_41] : memref<4x512xf32, #tpu.memory_space<vmem>>, vector<4x512xf32>
    %81 = vector.extract_strided_slice %80 {offsets = [0, 111], sizes = [4, 256], strides = [1, 1]} : vector<4x512xf32> to vector<4x256xf32>
    %82 = vector.broadcast %33 : vector<1x256xf32> to vector<4x256xf32>
    %83 = arith.mulf %81, %82 : vector<4x256xf32>
    %c72 = arith.constant 72 : index
    %c0_42 = arith.constant 0 : index
    %84 = vector.load %arg8[%c72, %c0_42] : memref<109x256xf32, #tpu.memory_space<vmem>>, vector<4x256xf32>
    tpu.vector_store %arg8[%c72, %c0_42], %83 {strides = array<i32>} : memref<109x256xf32, #tpu.memory_space<vmem>>, vector<4x256xf32>,
    %85 = vector.extract_strided_slice %80 {offsets = [0, 112], sizes = [4, 256], strides = [1, 1]} : vector<4x512xf32> to vector<4x256xf32>
    %c76 = arith.constant 76 : index
    %c0_43 = arith.constant 0 : index
    %86 = vector.load %arg8[%c76, %c0_43] : memref<109x256xf32, #tpu.memory_space<vmem>>, vector<4x256xf32>
    tpu.vector_store %arg8[%c76, %c0_43], %85 {strides = array<i32>} : memref<109x256xf32, #tpu.memory_space<vmem>>, vector<4x256xf32>,
    %87 = vector.extract_strided_slice %80 {offsets = [0, 113], sizes = [4, 256], strides = [1, 1]} : vector<4x512xf32> to vector<4x256xf32>
    %88 = vector.broadcast %40 : vector<1x256xf32> to vector<4x256xf32>
    %89 = arith.mulf %87, %88 : vector<4x256xf32>
    %c80 = arith.constant 80 : index
    %c0_44 = arith.constant 0 : index
    %90 = vector.load %arg8[%c80, %c0_44] : memref<109x256xf32, #tpu.memory_space<vmem>>, vector<4x256xf32>
    tpu.vector_store %arg8[%c80, %c0_44], %89 {strides = array<i32>} : memref<109x256xf32, #tpu.memory_space<vmem>>, vector<4x256xf32>,
    %91 = vector.extract_strided_slice %80 {offsets = [0, 127], sizes = [4, 256], strides = [1, 1]} : vector<4x512xf32> to vector<4x256xf32>
    %92 = vector.broadcast %33 : vector<1x256xf32> to vector<4x256xf32>
    %93 = arith.mulf %91, %92 : vector<4x256xf32>
    %c84 = arith.constant 84 : index
    %c0_45 = arith.constant 0 : index
    %94 = vector.load %arg8[%c84, %c0_45] : memref<109x256xf32, #tpu.memory_space<vmem>>, vector<4x256xf32>
    tpu.vector_store %arg8[%c84, %c0_45], %93 {strides = array<i32>} : memref<109x256xf32, #tpu.memory_space<vmem>>, vector<4x256xf32>,
    %95 = vector.extract_strided_slice %80 {offsets = [0, 128], sizes = [4, 256], strides = [1, 1]} : vector<4x512xf32> to vector<4x256xf32>
    %c88 = arith.constant 88 : index
    %c0_46 = arith.constant 0 : index
    %96 = vector.load %arg8[%c88, %c0_46] : memref<109x256xf32, #tpu.memory_space<vmem>>, vector<4x256xf32>
    tpu.vector_store %arg8[%c88, %c0_46], %95 {strides = array<i32>} : memref<109x256xf32, #tpu.memory_space<vmem>>, vector<4x256xf32>,
    %97 = vector.extract_strided_slice %80 {offsets = [0, 129], sizes = [4, 256], strides = [1, 1]} : vector<4x512xf32> to vector<4x256xf32>
    %98 = vector.broadcast %40 : vector<1x256xf32> to vector<4x256xf32>
    %99 = arith.mulf %97, %98 : vector<4x256xf32>
    %c92 = arith.constant 92 : index
    %c0_47 = arith.constant 0 : index
    %100 = vector.load %arg8[%c92, %c0_47] : memref<109x256xf32, #tpu.memory_space<vmem>>, vector<4x256xf32>
    tpu.vector_store %arg8[%c92, %c0_47], %99 {strides = array<i32>} : memref<109x256xf32, #tpu.memory_space<vmem>>, vector<4x256xf32>,
    %101 = vector.extract_strided_slice %80 {offsets = [0, 143], sizes = [4, 256], strides = [1, 1]} : vector<4x512xf32> to vector<4x256xf32>
    %102 = vector.broadcast %33 : vector<1x256xf32> to vector<4x256xf32>
    %103 = arith.mulf %101, %102 : vector<4x256xf32>
    %c96 = arith.constant 96 : index
    %c0_48 = arith.constant 0 : index
    %104 = vector.load %arg8[%c96, %c0_48] : memref<109x256xf32, #tpu.memory_space<vmem>>, vector<4x256xf32>
    tpu.vector_store %arg8[%c96, %c0_48], %103 {strides = array<i32>} : memref<109x256xf32, #tpu.memory_space<vmem>>, vector<4x256xf32>,
    %105 = vector.extract_strided_slice %80 {offsets = [0, 144], sizes = [4, 256], strides = [1, 1]} : vector<4x512xf32> to vector<4x256xf32>
    %c100 = arith.constant 100 : index
    %c0_49 = arith.constant 0 : index
    %106 = vector.load %arg8[%c100, %c0_49] : memref<109x256xf32, #tpu.memory_space<vmem>>, vector<4x256xf32>
    tpu.vector_store %arg8[%c100, %c0_49], %105 {strides = array<i32>} : memref<109x256xf32, #tpu.memory_space<vmem>>, vector<4x256xf32>,
    %107 = vector.extract_strided_slice %80 {offsets = [0, 145], sizes = [4, 256], strides = [1, 1]} : vector<4x512xf32> to vector<4x256xf32>
    %108 = vector.broadcast %40 : vector<1x256xf32> to vector<4x256xf32>
    %109 = arith.mulf %107, %108 : vector<4x256xf32>
    %c104 = arith.constant 104 : index
    %c0_50 = arith.constant 0 : index
    %110 = vector.load %arg8[%c104, %c0_50] : memref<109x256xf32, #tpu.memory_space<vmem>>, vector<4x256xf32>
    tpu.vector_store %arg8[%c104, %c0_50], %109 {strides = array<i32>} : memref<109x256xf32, #tpu.memory_space<vmem>>, vector<4x256xf32>,
    %c0_51 = arith.constant 0 : index
    %c0_52 = arith.constant 0 : index
    %111 = vector.load %arg8[%c0_51, %c0_52] : memref<109x256xf32, #tpu.memory_space<vmem>>, vector<109x256xf32>
    %cst_53 = arith.constant dense<0.000000e+00> : vector<24x256xf32>
    %112 = tpu.matmul %41, %111, %cst_53 {dimension_numbers = #tpu.dot_dimension_numbers<[1], [0], [0], [1], [0, 0, 1, 1], [], []>} : vector<24x109xf32>, vector<109x256xf32>, vector<24x256xf32> -> vector<24x256xf32>
    %113 = vector.extract_strided_slice %112 {offsets = [0, 0], sizes = [8, 256], strides = [1, 1]} : vector<24x256xf32> to vector<8x256xf32>
    %114 = arith.negf %113 : vector<8x256xf32>
    %115 = math.exp %114 : vector<8x256xf32>
    %cst_54 = arith.constant 1.000000e+00 : f32
    %116 = vector.broadcast %cst_54 : f32 to vector<8x256xf32>
    %117 = arith.addf %116, %115 : vector<8x256xf32>
    %118 = arith.divf %116, %117 : vector<8x256xf32>
    %119 = vector.extract_strided_slice %112 {offsets = [8, 0], sizes = [8, 256], strides = [1, 1]} : vector<24x256xf32> to vector<8x256xf32>
    %120 = arith.negf %119 : vector<8x256xf32>
    %121 = math.exp %120 : vector<8x256xf32>
    %cst_55 = arith.constant 1.000000e+00 : f32
    %122 = vector.broadcast %cst_55 : f32 to vector<8x256xf32>
    %123 = arith.addf %122, %121 : vector<8x256xf32>
    %124 = arith.divf %122, %123 : vector<8x256xf32>
    %125 = arith.mulf %46, %124 : vector<8x256xf32>
    %c0_56 = arith.constant 0 : index
    %c128_57 = arith.constant 128 : index
    %126 = vector.load %arg7[%c0_56, %c128_57] : memref<8x512xf32, #tpu.memory_space<vmem>>, vector<8x256xf32>
    tpu.vector_store %arg7[%c0_56, %c128_57], %125 {strides = array<i32>} : memref<8x512xf32, #tpu.memory_space<vmem>>, vector<8x256xf32>,
    %c0_58 = arith.constant 0 : index
    %c0_59 = arith.constant 0 : index
    %127 = vector.load %arg7[%c0_58, %c0_59] : memref<8x512xf32, #tpu.memory_space<vmem>>, vector<8x512xf32>
    %128 = vector.extract_strided_slice %127 {offsets = [0, 111], sizes = [8, 256], strides = [1, 1]} : vector<8x512xf32> to vector<8x256xf32>
    %129 = vector.broadcast %33 : vector<1x256xf32> to vector<8x256xf32>
    %130 = arith.mulf %128, %129 : vector<8x256xf32>
    %c0_60 = arith.constant 0 : index
    %c0_61 = arith.constant 0 : index
    %131 = vector.load %arg8[%c0_60, %c0_61] : memref<109x256xf32, #tpu.memory_space<vmem>>, vector<8x256xf32>
    tpu.vector_store %arg8[%c0_60, %c0_61], %130 {strides = array<i32>} : memref<109x256xf32, #tpu.memory_space<vmem>>, vector<8x256xf32>,
    %132 = vector.extract_strided_slice %127 {offsets = [0, 112], sizes = [8, 256], strides = [1, 1]} : vector<8x512xf32> to vector<8x256xf32>
    %c8_62 = arith.constant 8 : index
    %c0_63 = arith.constant 0 : index
    %133 = vector.load %arg8[%c8_62, %c0_63] : memref<109x256xf32, #tpu.memory_space<vmem>>, vector<8x256xf32>
    tpu.vector_store %arg8[%c8_62, %c0_63], %132 {strides = array<i32>} : memref<109x256xf32, #tpu.memory_space<vmem>>, vector<8x256xf32>,
    %134 = vector.extract_strided_slice %127 {offsets = [0, 113], sizes = [8, 256], strides = [1, 1]} : vector<8x512xf32> to vector<8x256xf32>
    %135 = vector.broadcast %40 : vector<1x256xf32> to vector<8x256xf32>
    %136 = arith.mulf %134, %135 : vector<8x256xf32>
    %c16_64 = arith.constant 16 : index
    %c0_65 = arith.constant 0 : index
    %137 = vector.load %arg8[%c16_64, %c0_65] : memref<109x256xf32, #tpu.memory_space<vmem>>, vector<8x256xf32>
    tpu.vector_store %arg8[%c16_64, %c0_65], %136 {strides = array<i32>} : memref<109x256xf32, #tpu.memory_space<vmem>>, vector<8x256xf32>,
    %138 = vector.extract_strided_slice %127 {offsets = [0, 127], sizes = [8, 256], strides = [1, 1]} : vector<8x512xf32> to vector<8x256xf32>
    %139 = vector.broadcast %33 : vector<1x256xf32> to vector<8x256xf32>
    %140 = arith.mulf %138, %139 : vector<8x256xf32>
    %c24_66 = arith.constant 24 : index
    %c0_67 = arith.constant 0 : index
    %141 = vector.load %arg8[%c24_66, %c0_67] : memref<109x256xf32, #tpu.memory_space<vmem>>, vector<8x256xf32>
    tpu.vector_store %arg8[%c24_66, %c0_67], %140 {strides = array<i32>} : memref<109x256xf32, #tpu.memory_space<vmem>>, vector<8x256xf32>,
    %142 = vector.extract_strided_slice %127 {offsets = [0, 128], sizes = [8, 256], strides = [1, 1]} : vector<8x512xf32> to vector<8x256xf32>
    %c32_68 = arith.constant 32 : index
    %c0_69 = arith.constant 0 : index
    %143 = vector.load %arg8[%c32_68, %c0_69] : memref<109x256xf32, #tpu.memory_space<vmem>>, vector<8x256xf32>
    tpu.vector_store %arg8[%c32_68, %c0_69], %142 {strides = array<i32>} : memref<109x256xf32, #tpu.memory_space<vmem>>, vector<8x256xf32>,
    %144 = vector.extract_strided_slice %127 {offsets = [0, 129], sizes = [8, 256], strides = [1, 1]} : vector<8x512xf32> to vector<8x256xf32>
    %145 = vector.broadcast %40 : vector<1x256xf32> to vector<8x256xf32>
    %146 = arith.mulf %144, %145 : vector<8x256xf32>
    %c40_70 = arith.constant 40 : index
    %c0_71 = arith.constant 0 : index
    %147 = vector.load %arg8[%c40_70, %c0_71] : memref<109x256xf32, #tpu.memory_space<vmem>>, vector<8x256xf32>
    tpu.vector_store %arg8[%c40_70, %c0_71], %146 {strides = array<i32>} : memref<109x256xf32, #tpu.memory_space<vmem>>, vector<8x256xf32>,
    %148 = vector.extract_strided_slice %127 {offsets = [0, 143], sizes = [8, 256], strides = [1, 1]} : vector<8x512xf32> to vector<8x256xf32>
    %149 = vector.broadcast %33 : vector<1x256xf32> to vector<8x256xf32>
    %150 = arith.mulf %148, %149 : vector<8x256xf32>
    %c48_72 = arith.constant 48 : index
    %c0_73 = arith.constant 0 : index
    %151 = vector.load %arg8[%c48_72, %c0_73] : memref<109x256xf32, #tpu.memory_space<vmem>>, vector<8x256xf32>
    tpu.vector_store %arg8[%c48_72, %c0_73], %150 {strides = array<i32>} : memref<109x256xf32, #tpu.memory_space<vmem>>, vector<8x256xf32>,
    %152 = vector.extract_strided_slice %127 {offsets = [0, 144], sizes = [8, 256], strides = [1, 1]} : vector<8x512xf32> to vector<8x256xf32>
    %c56_74 = arith.constant 56 : index
    %c0_75 = arith.constant 0 : index
    %153 = vector.load %arg8[%c56_74, %c0_75] : memref<109x256xf32, #tpu.memory_space<vmem>>, vector<8x256xf32>
    tpu.vector_store %arg8[%c56_74, %c0_75], %152 {strides = array<i32>} : memref<109x256xf32, #tpu.memory_space<vmem>>, vector<8x256xf32>,
    %154 = vector.extract_strided_slice %127 {offsets = [0, 145], sizes = [8, 256], strides = [1, 1]} : vector<8x512xf32> to vector<8x256xf32>
    %155 = vector.broadcast %40 : vector<1x256xf32> to vector<8x256xf32>
    %156 = arith.mulf %154, %155 : vector<8x256xf32>
    %c64_76 = arith.constant 64 : index
    %c0_77 = arith.constant 0 : index
    %157 = vector.load %arg8[%c64_76, %c0_77] : memref<109x256xf32, #tpu.memory_space<vmem>>, vector<8x256xf32>
    tpu.vector_store %arg8[%c64_76, %c0_77], %156 {strides = array<i32>} : memref<109x256xf32, #tpu.memory_space<vmem>>, vector<8x256xf32>,
    %c0_78 = arith.constant 0 : index
    %c0_79 = arith.constant 0 : index
    %158 = vector.load %arg8[%c0_78, %c0_79] : memref<109x256xf32, #tpu.memory_space<vmem>>, vector<72x256xf32>
    %cst_80 = arith.constant dense<0.000000e+00> : vector<8x256xf32>
    %159 = tpu.matmul %42, %158, %cst_80 {dimension_numbers = #tpu.dot_dimension_numbers<[1], [0], [0], [1], [0, 0, 1, 1], [], []>} : vector<8x72xf32>, vector<72x256xf32>, vector<8x256xf32> -> vector<8x256xf32>
    %160 = vector.extract_strided_slice %112 {offsets = [16, 0], sizes = [8, 256], strides = [1, 1]} : vector<24x256xf32> to vector<8x256xf32>
    %161 = arith.addf %160, %159 : vector<8x256xf32>
    %162 = math.tanh %161 : vector<8x256xf32>
    %cst_81 = arith.constant 1.000000e+00 : f32
    %163 = vector.broadcast %cst_81 : f32 to vector<8x256xf32>
    %164 = arith.subf %163, %118 : vector<8x256xf32>
    %165 = arith.mulf %46, %164 : vector<8x256xf32>
    %166 = arith.mulf %162, %118 : vector<8x256xf32>
    %167 = arith.addf %165, %166 : vector<8x256xf32>
    %c0_82 = arith.constant 0 : index
    %c0_83 = arith.constant 0 : index
    %c0_84 = arith.constant 0 : index
    %168 = vector.load %arg5[%c0_82, %c0_83, %c0_84] : memref<1x8x256xf32, #tpu.memory_space<vmem>>, vector<1x8x256xf32>
    %169 = vector.shape_cast %168 : vector<1x8x256xf32> to vector<8x256xf32>
    %170 = vector.shape_cast %167 : vector<8x256xf32> to vector<1x8x256xf32>
    tpu.vector_store %arg5[%c0_82, %c0_83, %c0_84], %170 {strides = array<i32>} : memref<1x8x256xf32, #tpu.memory_space<vmem>>, vector<1x8x256xf32>,
    return
  }
  func.func @transform_0(%arg0: i32) -> (i32, i32, i32) {
    %c0_i32 = arith.constant 0 : i32
    %c0_i32_0 = arith.constant 0 : i32
    %c0_i32_1 = arith.constant 0 : i32
    return %arg0, %c0_i32, %c0_i32_0 : i32, i32, i32
  }
  func.func @transform_1(%arg0: i32) -> (i32, i32, i32) {
    %c0_i32 = arith.constant 0 : i32
    %c0_i32_0 = arith.constant 0 : i32
    %c0_i32_1 = arith.constant 0 : i32
    return %arg0, %c0_i32, %c0_i32_0 : i32, i32, i32
  }
  func.func @transform_2(%arg0: i32) -> (i32, i32) {
    %c0_i32 = arith.constant 0 : i32
    %c0_i32_0 = arith.constant 0 : i32
    %c0_i32_1 = arith.constant 0 : i32
    return %c0_i32, %c0_i32_0 : i32, i32
  }
  func.func @transform_3(%arg0: i32) -> (i32, i32) {
    %c0_i32 = arith.constant 0 : i32
    %c0_i32_0 = arith.constant 0 : i32
    %c0_i32_1 = arith.constant 0 : i32
    return %c0_i32, %c0_i32_0 : i32, i32
  }
  func.func @transform_4(%arg0: i32) -> (i32, i32, i32) {
    %c0_i32 = arith.constant 0 : i32
    %c0_i32_0 = arith.constant 0 : i32
    %c0_i32_1 = arith.constant 0 : i32
    return %arg0, %c0_i32, %c0_i32_0 : i32, i32, i32
  }
}

</mosaic_0001>

<llo_original>
// kernel: tpu_custom_call.1
$region0: #{tpu_custom_call.1}
  #allocation0 [shape = 'u32[]', space=smem, size = 0x4, offset = 0x4, fixed_abs, tag = 'smem constant byte address 0x4 - core index']
  #allocation1 [shape = 'u32[72,128]{1,0:T(1,128)}', space=vmem, size = 0x9000, scoped, tag = 'internal scratch']
  #allocation2 [shape = 'f32[4,512]{1,0:T(4,128)}', space=vmem, size = 0x2000, scoped, tag = 'scratch operand']
  #allocation3 [shape = 'f32[8,512]{1,0:T(8,128)}', space=vmem, size = 0x4000, scoped, tag = 'scratch operand']
  #allocation4 [shape = 'f32[109,256]{1,0:T(8,128)}', space=vmem, size = 0x1c000, scoped, tag = 'scratch operand']
  %s0 = inlined_call_operand.hbm [shape: f32[2,4,256], index: 0, kind: input, shape index: {}]
  %s1 = inlined_call_operand.hbm [shape: f32[2,8,256], index: 1, kind: input, shape index: {}]
  %s2 = inlined_call_operand.hbm [shape: f32[24,109], index: 2, kind: input, shape index: {}]
  %s3 = inlined_call_operand.hbm [shape: f32[8,72], index: 3, kind: input, shape index: {}]
  %s4 = inlined_call_operand.hbm [shape: f32[2,8,256], index: 4, kind: output, shape index: {}]
  %s5 = sld [smem:[#allocation0]]
  $region65: #{tpu_custom_call.1} parent=0
    _
  %s7 = ssub.s32 1, %s5
  %s8 = scalar_select 0, %s7, %s5
  $region1: #{tpu_custom_call.1} parent=0
    #allocation5 [shape = 'u8[8192]{0}', space=vmem, size = 0x2000, scoped, tag = 'input window, operand 0']
    #allocation6 [shape = 's32[2]{0}', space=sflag, size = 0x8, scoped, tag = 'scoped memory for tpu_custom_call.1']
    #allocation7 [shape = 's32[2]{0}', space=sflag, size = 0x8, scoped, tag = 'scoped memory for tpu_custom_call.1']
    #allocation8 [shape = 'u8[16384]{0}', space=vmem, size = 0x4000, scoped, tag = 'input window, operand 1']
    #allocation9 [shape = 's32[2]{0}', space=sflag, size = 0x8, scoped, tag = 'scoped memory for tpu_custom_call.1']
    #allocation10 [shape = 'u8[12288]{0}', space=vmem, size = 0x3000, scoped, tag = 'input window, operand 2, single buffered']
    #allocation11 [shape = 'u8[4096]{0}', space=vmem, size = 0x1000, scoped, tag = 'input window, operand 3, single buffered']
    #allocation12 [shape = 's32[1]{0}', space=sflag, size = 0x4, scoped, tag = 'scoped memory for tpu_custom_call.1']
    #allocation13 [shape = 'u8[16384]{0}', space=vmem, size = 0x4000, scoped, tag = 'output window, operand 0']
    %9 = vsyncpa [#allocation6], 0
    %s10 = scalar_lea.sflag [#allocation6], 1
    %11 = vsyncpa %s10, 0
    %12 = vsyncpa [#allocation9], 0
    %s13 = scalar_lea.sflag [#allocation9], 1
    %14 = vsyncpa %s13, 0
    %15 = vsyncpa [#allocation12], 0
    %16 = vsyncpa [#allocation7], 0
    %s17 = scalar_lea.sflag [#allocation7], 1
    %18 = vsyncpa %s17, 0
    loop: start=0, step=1, limit=4
    $region2: #{tpu_custom_call.1} parent=1 // loop_pre_header
      _
    $region3: #{tpu_custom_call.1} parent=1 // loop_header
      %s20 = sphi 0, %s24
      %p21 = scmp.ge.s32.totalorder %s20, 4
      %s30 = sphi 0, %s32
      %s33 = sphi 0, %s30
      %s34 = sphi 0, %s33
      %s50 = sphi 0, %s34
      %s56 = sphi 0, %s58
      %s59 = sphi 0, %s56
      %s60 = sphi 0, %s59
      %s76 = sphi 0, %s60
      %s80 = sphi 0, %s80
      %s82 = sphi 0, %s80
      %s83 = sphi 0, %s82
      %s97 = sphi 0, %s83
      %s101 = sphi 0, %s101
      %s103 = sphi 0, %s101
      %s104 = sphi 0, %s103
      %s118 = sphi 0, %s104
      %s124 = sphi 0, %s126
      %s127 = sphi 0, %s124
      %s128 = sphi 0, %s127
      %s144 = sphi 0, %s128
    $region4: #{tpu_custom_call.1} parent=1 // loop_header_branch
      %23 = sbr.rel (%p21) target = $region8
    $region5: #{tpu_custom_call.1} parent=1 // loop_body
      %s25 = ssub.s32 %s20, 1
      %s26 = ssub.s32 %s20, 2
      %s27 = sadd.s32 %s20, 1
      %s28 = ssub.s32 %s20, %s27
      %p29 = scmp.eq.s32.totalorder %s28, 0
      %s31 = sadd.s32 %s30, 1
      %s32 = scalar_select %p29, %s30, %s31
      %p35 = pneg %p29
      %p36 = scmp.eq.s32.totalorder %s20, 1
      %p37 = por %p35, %p36
      %p38 = scmp.ne.s32.totalorder %s30, %s33
      %p39 = scmp.eq.s32.totalorder %s20, 0
      %p40 = por %p38, %p39
      %p41 = scmp.ne.s32.totalorder %s30, %s33
      %p42 = scmp.eq.s32.totalorder %s25, 1
      %p43 = por %p41, %p42
      %p44 = scmp.ne.s32.totalorder %s33, %s34
      %p45 = scmp.eq.s32.totalorder %s25, 0
      %p46 = por %p44, %p45
      %p47 = scmp.ne.s32.totalorder %s33, %s34
      %p48 = scmp.eq.s32.totalorder %s26, 1
      %p49 = por %p47, %p48
      %p51 = scmp.ne.s32.totalorder %s34, %s50
      %p52 = scmp.eq.s32.totalorder %s26, 0
      %p53 = por %p51, %p52
      %s54 = ssub.s32 %s20, %s27
      %p55 = scmp.eq.s32.totalorder %s54, 0
      %s57 = sadd.s32 %s56, 1
      %s58 = scalar_select %p55, %s56, %s57
      %p61 = pneg %p55
      %p62 = scmp.eq.s32.totalorder %s20, 1
      %p63 = por %p61, %p62
      %p64 = scmp.ne.s32.totalorder %s56, %s59
      %p65 = scmp.eq.s32.totalorder %s20, 0
      %p66 = por %p64, %p65
      %p67 = scmp.ne.s32.totalorder %s56, %s59
      %p68 = scmp.eq.s32.totalorder %s25, 1
      %p69 = por %p67, %p68
      %p70 = scmp.ne.s32.totalorder %s59, %s60
      %p71 = scmp.eq.s32.totalorder %s25, 0
      %p72 = por %p70, %p71
      %p73 = scmp.ne.s32.totalorder %s59, %s60
      %p74 = scmp.eq.s32.totalorder %s26, 1
      %p75 = por %p73, %p74
      %p77 = scmp.ne.s32.totalorder %s60, %s76
      %p78 = scmp.eq.s32.totalorder %s26, 0
      %p79 = por %p77, %p78
      %s81 = sadd.s32 %s80, 1
      %p84 = scmp.eq.s32.totalorder %s20, 1
      %p85 = scmp.ne.s32.totalorder %s80, %s82
      %p86 = scmp.eq.s32.totalorder %s20, 0
      %p87 = por %p85, %p86
      %p88 = scmp.ne.s32.totalorder %s80, %s82
      %p89 = scmp.eq.s32.totalorder %s25, 1
      %p90 = por %p88, %p89
      %p91 = scmp.ne.s32.totalorder %s82, %s83
      %p92 = scmp.eq.s32.totalorder %s25, 0
      %p93 = por %p91, %p92
      %p94 = scmp.ne.s32.totalorder %s82, %s83
      %p95 = scmp.eq.s32.totalorder %s26, 1
      %p96 = por %p94, %p95
      %p98 = scmp.ne.s32.totalorder %s83, %s97
      %p99 = scmp.eq.s32.totalorder %s26, 0
      %p100 = por %p98, %p99
      %s102 = sadd.s32 %s101, 1
      %p105 = scmp.eq.s32.totalorder %s20, 1
      %p106 = scmp.ne.s32.totalorder %s101, %s103
      %p107 = scmp.eq.s32.totalorder %s20, 0
      %p108 = por %p106, %p107
      %p109 = scmp.ne.s32.totalorder %s101, %s103
      %p110 = scmp.eq.s32.totalorder %s25, 1
      %p111 = por %p109, %p110
      %p112 = scmp.ne.s32.totalorder %s103, %s104
      %p113 = scmp.eq.s32.totalorder %s25, 0
      %p114 = por %p112, %p113
      %p115 = scmp.ne.s32.totalorder %s103, %s104
      %p116 = scmp.eq.s32.totalorder %s26, 1
      %p117 = por %p115, %p116
      %p119 = scmp.ne.s32.totalorder %s104, %s118
      %p120 = scmp.eq.s32.totalorder %s26, 0
      %p121 = por %p119, %p120
      %s122 = ssub.s32 %s20, %s27
      %p123 = scmp.eq.s32.totalorder %s122, 0
      %s125 = sadd.s32 %s124, 1
      %s126 = scalar_select %p123, %s124, %s125
      %p129 = pneg %p123
      %p130 = scmp.eq.s32.totalorder %s20, 1
      %p131 = por %p129, %p130
      %p132 = scmp.ne.s32.totalorder %s124, %s127
      %p133 = scmp.eq.s32.totalorder %s20, 0
      %p134 = por %p132, %p133
      %p135 = scmp.ne.s32.totalorder %s124, %s127
      %p136 = scmp.eq.s32.totalorder %s25, 1
      %p137 = por %p135, %p136
      %p138 = scmp.ne.s32.totalorder %s127, %s128
      %p139 = scmp.eq.s32.totalorder %s25, 0
      %p140 = por %p138, %p139
      %p141 = scmp.ne.s32.totalorder %s127, %s128
      %p142 = scmp.eq.s32.totalorder %s26, 1
      %p143 = por %p141, %p142
      %p145 = scmp.ne.s32.totalorder %s128, %s144
      %p146 = scmp.eq.s32.totalorder %s26, 0
      %p147 = por %p145, %p146
      %p148 = scmp.le.s32.totalorder 1, %s20
      %p149 = scmp.lt.s32.totalorder %s20, 3
      %p150 = pnand %p148, %p149
      %p151 = pneg %p150
      // Predicated region
      $region9: #{tpu_custom_call.1} parent=5 // pred_check
        _
      $region10: #{tpu_custom_call.1} parent=5 // pred_check_branch
        %153 = sbr.rel (%p150) target = $region12
      $region11: #{tpu_custom_call.1} parent=5 // pred_region
        %s154 = ssub.s32 %s20, 1
        // Predicated region
        $region13: #{tpu_custom_call.1} parent=11 // pred_check
          %p155 = pneg %p93
        $region14: #{tpu_custom_call.1} parent=11 // pred_check_branch
          %157 = sbr.rel (%p155) target = $region16
        $region15: #{tpu_custom_call.1} parent=11 // pred_region
          %159 = vsyncadd [#allocation9], 0
          %s160 = sshll.u32 %s2, 4
          %s161 = int_to_ptr.hbm [resolvable:$true] %s160
          %s162 = sshll.u32 [#allocation10], 4
          %s163 = int_to_ptr.vmem [resolvable:$true] %s162
          %168 = dma.hbm_to_vmem [thread:$0]  %s161, 384, %s163, [#allocation9], 128, 128, 8
        $region16: #{tpu_custom_call.1} parent=11 // pred_fallthru
          _
        // Predicated region
        $region17: #{tpu_custom_call.1} parent=11 // pred_check
          %p169 = pneg %p114
        $region18: #{tpu_custom_call.1} parent=11 // pred_check_branch
          %171 = sbr.rel (%p169) target = $region20
        $region19: #{tpu_custom_call.1} parent=11 // pred_region
          %173 = vsyncadd [#allocation12], 0
          %s175 = sshll.u32 %s3, 4
          %s176 = int_to_ptr.hbm [resolvable:$true] %s175
          %s177 = sshll.u32 [#allocation11], 4
          %s178 = int_to_ptr.vmem [resolvable:$true] %s177
          %180 = dma.hbm_to_vmem [thread:$0]  %s176, 128, %s178, [#allocation12]
        $region20: #{tpu_custom_call.1} parent=11 // pred_fallthru
          _
      $region12: #{tpu_custom_call.1} parent=5 // pred_fallthru
        _
      %p181 = scmp.lt.s32.totalorder %s20, 2
      // Predicated region
      $region21: #{tpu_custom_call.1} parent=5 // pred_check
        %p182 = pneg %p181
      $region22: #{tpu_custom_call.1} parent=5 // pred_check_branch
        %184 = sbr.rel (%p182) target = $region24
      $region23: #{tpu_custom_call.1} parent=5 // pred_region
        // Predicated region
        $region25: #{tpu_custom_call.1} parent=23 // pred_check
          %p185 = pneg %p40
        $region26: #{tpu_custom_call.1} parent=23 // pred_check_branch
          %187 = sbr.rel (%p185) target = $region28
        $region27: #{tpu_custom_call.1} parent=23 // pred_region
          %s188 = sand.u32 %s30, 1
          %s189 = scalar_lea.sflag [#allocation6], %s188
          %s190 = sand.u32 %s30, 1
          %s191 = smul.addr %s190, 8
          %s192 = scalar_lea.vmem [#allocation5], %s191
          %194 = vsyncadd %s189, 0
          %s195 = smul.addr %s20, 2
          %s196 = smul.addr %s195, 4
          %s197 = scalar_lea.hbm %s0, %s196
          %s199 = sshll.u32 %s197, 4
          %s200 = int_to_ptr.hbm [resolvable:$true] %s199
          %s201 = sshll.u32 %s192, 4
          %s202 = int_to_ptr.vmem [resolvable:$true] %s201
          %204 = dma.hbm_to_vmem [thread:$0]  %s200, 128, %s202, %s189
        $region28: #{tpu_custom_call.1} parent=23 // pred_fallthru
          _
        // Predicated region
        $region29: #{tpu_custom_call.1} parent=23 // pred_check
          %p205 = pneg %p66
        $region30: #{tpu_custom_call.1} parent=23 // pred_check_branch
          %207 = sbr.rel (%p205) target = $region32
        $region31: #{tpu_custom_call.1} parent=23 // pred_region
          %s208 = sand.u32 %s20, 1
          %s209 = scalar_lea.sflag [#allocation9], %s208
          %s210 = sand.u32 %s56, 1
          %s211 = smul.addr %s210, 16
          %s212 = scalar_lea.vmem [#allocation8], %s211
          %214 = vsyncadd %s209, 0
          %s215 = smul.addr %s20, 2
          %s216 = smul.addr %s215, 8
          %s217 = scalar_lea.hbm %s1, %s216
          %s219 = sshll.u32 %s217, 4
          %s220 = int_to_ptr.hbm [resolvable:$true] %s219
          %s221 = sshll.u32 %s212, 4
          %s222 = int_to_ptr.vmem [resolvable:$true] %s221
          %224 = dma.hbm_to_vmem [thread:$0]  %s220, 256, %s222, %s209
        $region32: #{tpu_custom_call.1} parent=23 // pred_fallthru
          _
      $region24: #{tpu_custom_call.1} parent=5 // pred_fallthru
        _
      %p225 = scmp.le.s32.totalorder 1, %s20
      %p226 = scmp.lt.s32.totalorder %s20, 3
      %p227 = pnand %p225, %p226
      %p228 = pneg %p227
      // Predicated region
      $region33: #{tpu_custom_call.1} parent=5 // pred_check
        _
      $region34: #{tpu_custom_call.1} parent=5 // pred_check_branch
        %230 = sbr.rel (%p227) target = $region36
      $region35: #{tpu_custom_call.1} parent=5 // pred_region
        %s231 = ssub.s32 %s20, 1
        %s232 = sand.u32 %s33, 1
        %s233 = scalar_lea.sflag [#allocation6], %s232
        %s234 = sand.u32 %s33, 1
        %s235 = smul.addr %s234, 8
        %s236 = scalar_lea.vmem [#allocation5], %s235
        // Predicated region
        $region37: #{tpu_custom_call.1} parent=35 // pred_check
          %p237 = pneg %p46
        $region38: #{tpu_custom_call.1} parent=35 // pred_check_branch
          %239 = sbr.rel (%p237) target = $region40
        $region39: #{tpu_custom_call.1} parent=35 // pred_region
          %241 = dma.done %s233, 128
        $region40: #{tpu_custom_call.1} parent=35 // pred_fallthru
          _
        %s242 = sand.u32 %s25, 1
        %s243 = scalar_lea.sflag [#allocation9], %s242
        %s244 = sand.u32 %s59, 1
        %s245 = smul.addr %s244, 16
        %s246 = scalar_lea.vmem [#allocation8], %s245
        // Predicated region
        $region41: #{tpu_custom_call.1} parent=35 // pred_check
          %p247 = pneg %p72
        $region42: #{tpu_custom_call.1} parent=35 // pred_check_branch
          %249 = sbr.rel (%p247) target = $region44
        $region43: #{tpu_custom_call.1} parent=35 // pred_region
          %251 = dma.done %s243, 256
        $region44: #{tpu_custom_call.1} parent=35 // pred_fallthru
          _
        // Predicated region
        $region45: #{tpu_custom_call.1} parent=35 // pred_check
          %p252 = pneg %p93
        $region46: #{tpu_custom_call.1} parent=35 // pred_check_branch
          %254 = sbr.rel (%p252) target = $region48
        $region47: #{tpu_custom_call.1} parent=35 // pred_region
          %256 = dma.done [#allocation9], 384
        $region48: #{tpu_custom_call.1} parent=35 // pred_fallthru
          _
        // Predicated region
        $region49: #{tpu_custom_call.1} parent=35 // pred_check
          %p257 = pneg %p114
        $region50: #{tpu_custom_call.1} parent=35 // pred_check_branch
          %259 = sbr.rel (%p257) target = $region52
        $region51: #{tpu_custom_call.1} parent=35 // pred_region
          %261 = dma.done [#allocation12], 128
        $region52: #{tpu_custom_call.1} parent=35 // pred_fallthru
          _
        %s262 = sand.u32 %s33, 1
        %s263 = scalar_lea.sflag [#allocation6], %s262
        %s264 = sand.u32 %s33, 1
        %s265 = smul.addr %s264, 8
        %s266 = scalar_lea.vmem [#allocation5], %s265
        %p267 = pneg %p46
        %p268 = pneg %p43
        %s269 = sand.u32 %s25, 1
        %s270 = scalar_lea.sflag [#allocation9], %s269
        %s271 = sand.u32 %s59, 1
        %s272 = smul.addr %s271, 16
        %s273 = scalar_lea.vmem [#allocation8], %s272
        %p274 = pneg %p72
        %p275 = pneg %p69
        %p276 = pneg %p93
        %p277 = pneg %p90
        %p278 = pneg %p114
        %p279 = pneg %p111
        %p280 = pneg %p140
        %p281 = pneg %p137
        %s282 = sand.u32 %s127, 1
        %s283 = scalar_lea.sflag [#allocation7], %s282
        %s284 = sand.u32 %s127, 1
        %s285 = smul.addr %s284, 16
        %s286 = scalar_lea.vmem [#allocation13], %s285
        %287 = vst [vmem:[#allocation2] sm:$0xf] 0.0
        %288 = vst [vmem:[#allocation3] sm:$0xff] 0.0
        %289 = vst [vmem:[#allocation2 + $0xc] sm:$0xf] 0.0
        %290 = vst [vmem:[#allocation3 + $0x18] sm:$0xff] 0.0
        %v291 = vlaneseq
        %vm292 = vcmp.ge.s32.totalorder %v291, 0
        %vm293 = vcmp.lt.s32.totalorder %v291, 256
        %vm294 = vmand %vm292, %vm293
        %s295 = scalar_lea.vmem [#allocation4], 212
        %296 = vst.msk [vmem:[%s295] ss:$8 sm:$0x3] %vm294, 1.0
        %297 = vst.msk [vmem:[%s295] ss:$8 sm:$0x0] %vm294, 1.0
        %v298 = vlaneseq
        %v299 = vand.u32 %v298, 127
        %v300 = vadd.s32 %v299, 128
        %vm301 = vcmp.lt.s32.totalorder %v299, 0
        %v302 = vsub.s32 0, %v299
        %v303 = vsel %vm301, %v302, %v299
        %v304 = vshrl.u32 %v303, 4
        %v305 = vand.u32 %v303, 15
        %v306 = vsub.s32 0, %v305
        %v307 = vsel %vm301, %v306, %v305
        %vm308 = vcmp.lt.s32.totalorder %v300, 0
        %v309 = vsub.s32 0, %v300
        %v310 = vsel %vm308, %v309, %v300
        %v311 = vshrl.u32 %v310, 4
        %v312 = vand.u32 %v310, 15
        %v313 = vsub.s32 0, %v312
        %v314 = vsel %vm308, %v313, %v312
        %vm315 = vcmp.ne.s32.totalorder %v307, 0
        %vm316 = vcmp.ne.s32.totalorder %v314, 0
        %vm317 = vcmp.lt.s32.totalorder %v307, 0
        %vm318 = vcmp.lt.s32.totalorder %v314, 0
        %vm319 = vmand %vm317, %vm315
        %vm320 = vmand %vm318, %vm316
        %v321 = vadd.s32 %v307, 16
        %v322 = vadd.s32 %v314, 16
        %v323 = vsel %vm319, %v321, %v307
        %v324 = vsel %vm320, %v322, %v314
        %vm325 = vcmp.ge.s32.totalorder %v323, 1
        %vm326 = vcmp.ge.s32.totalorder %v324, 1
        %vm327 = vcmp.lt.s32.totalorder %v323, 17
        %vm328 = vcmp.lt.s32.totalorder %v324, 17
        %vm329 = vmand %vm325, %vm327
        %vm330 = vmand %vm326, %vm328
        %v331 = vsel %vm329, 1, 0
        %v332 = vsel %vm330, 1, 0
        %v333 = vcvt.s32.f32 %v331
        %v334 = vcvt.s32.f32 %v332
        %vm335 = vcmp.ge.s32.totalorder %v323, 4294967295
        %vm336 = vcmp.ge.s32.totalorder %v324, 4294967295
        %vm337 = vcmp.lt.s32.totalorder %v323, 15
        %vm338 = vcmp.lt.s32.totalorder %v324, 15
        %vm339 = vmand %vm335, %vm337
        %vm340 = vmand %vm336, %vm338
        %v341 = vsel %vm339, 1, 0
        %v342 = vsel %vm340, 1, 0
        %v343 = vcvt.s32.f32 %v341
        %v344 = vcvt.s32.f32 %v342
        %v345 = vld [vmem:[#allocation10] sm:$0xff]
        %v346 = vld [vmem:[#allocation10 + $0x8] sm:$0xff]
        %v347 = vld [vmem:[#allocation10 + $0x10] sm:$0xff]
        %v348 = vld [vmem:[#allocation11] sm:$0xff]
        %v349 = vld [vmem:[%s236] sm:$0xff]
        %v350 = vld [vmem:[%s246] sm:$0xff]
        %v351 = vld [vmem:[%s246 + $0x8] sm:$0xff]
        %352 = vst [vmem:[#allocation2 + $0x4] sm:$0xff] %v349
        %353 = vst [vmem:[#allocation3 + $0x8] sm:$0xff] %v350
        %354 = vst [vmem:[#allocation3 + $0x10] sm:$0xff] %v351
        %v355 = vld [vmem:[#allocation3] sm:$0xff]
        %v356 = vld [vmem:[#allocation3 + $0x8] sm:$0xff]
        %v357 = vld [vmem:[#allocation3 + $0x10] sm:$0xff]
        %v358 = vld [vmem:[#allocation3 + $0x18] sm:$0xff]
        %361 = vrot.lane.b32.xlu0 %v333, 111
        %v362 = vpop.permute.xlu0 %361
        %363 = vrot.lane.b32.xlu0 %v334, 111
        %v364 = vpop.permute.xlu0 %363
        %vm365 = vcmask 908288
        %v366 = vsel %vm365, %v362, %v364
        %v370 = vmul.f32 %v355, %v362
        %v371 = vmul.f32 %v356, %v366
        %v372 = vmul.f32 %v357, %v364
        %376 = vrot.lane.b32.xlu0 %v370, 17
        %v377 = vpop.permute.xlu0 %376
        %378 = vrot.lane.b32.xlu0 %v371, 17
        %v379 = vpop.permute.xlu0 %378
        %380 = vrot.lane.b32.xlu0 %v372, 17
        %v381 = vpop.permute.xlu0 %380
        %vm382 = vcmask 138240
        %v383 = vsel %vm382, %v377, %v379
        %v384 = vsel %vm382, %v379, %v381
        %387 = vst [vmem:[#allocation4] sm:$0xff] %v383
        %388 = vst [vmem:[#allocation4 + $0x8] sm:$0xff] %v384
        %392 = vrot.lane.b32.xlu0 %v355, 16
        %v393 = vpop.permute.xlu0 %392
        %394 = vrot.lane.b32.xlu0 %v356, 16
        %v395 = vpop.permute.xlu0 %394
        %396 = vrot.lane.b32.xlu0 %v357, 16
        %v397 = vpop.permute.xlu0 %396
        %vm398 = vcmask 130048
        %v399 = vsel %vm398, %v393, %v395
        %v400 = vsel %vm398, %v395, %v397
        %403 = vst [vmem:[#allocation4 + $0x10] sm:$0xff] %v399
        %404 = vst [vmem:[#allocation4 + $0x18] sm:$0xff] %v400
        %407 = vrot.lane.b32.xlu0 %v343, 113
        %v408 = vpop.permute.xlu0 %407
        %409 = vrot.lane.b32.xlu0 %v344, 113
        %v410 = vpop.permute.xlu0 %409
        %vm411 = vcmask 924672
        %v412 = vsel %vm411, %v408, %v410
        %v416 = vmul.f32 %v355, %v408
        %v417 = vmul.f32 %v356, %v412
        %v418 = vmul.f32 %v357, %v410
        %422 = vrot.lane.b32.xlu0 %v416, 15
        %v423 = vpop.permute.xlu0 %422
        %424 = vrot.lane.b32.xlu0 %v417, 15
        %v425 = vpop.permute.xlu0 %424
        %426 = vrot.lane.b32.xlu0 %v418, 15
        %v427 = vpop.permute.xlu0 %426
        %vm428 = vcmask 121856
        %v429 = vsel %vm428, %v423, %v425
        %v430 = vsel %vm428, %v425, %v427
        %433 = vst [vmem:[#allocation4 + $0x20] sm:$0xff] %v429
        %434 = vst [vmem:[#allocation4 + $0x28] sm:$0xff] %v430
        %435 = vrot.lane.b32.xlu0 %v333, 127
        %v436 = vpop.permute.xlu0 %435
        %437 = vrot.lane.b32.xlu0 %v334, 127
        %v438 = vpop.permute.xlu0 %437
        %vm439 = vcmask 1039360
        %v440 = vsel %vm439, %v436, %v438
        %v444 = vmul.f32 %v355, %v436
        %v445 = vmul.f32 %v356, %v440
        %v446 = vmul.f32 %v357, %v438
        %450 = vrot.lane.b32.xlu0 %v444, 1
        %v451 = vpop.permute.xlu0 %450
        %452 = vrot.lane.b32.xlu0 %v445, 1
        %v453 = vpop.permute.xlu0 %452
        %454 = vrot.lane.b32.xlu0 %v446, 1
        %v455 = vpop.permute.xlu0 %454
        %vm456 = vcmask 7168
        %v457 = vsel %vm456, %v451, %v453
        %v458 = vsel %vm456, %v453, %v455
        %461 = vst [vmem:[#allocation4 + $0x30] sm:$0xff] %v457
        %462 = vst [vmem:[#allocation4 + $0x38] sm:$0xff] %v458
        %463 = vst [vmem:[#allocation4 + $0x40] sm:$0xff] %v356
        %464 = vst [vmem:[#allocation4 + $0x48] sm:$0xff] %v357
        %465 = vrot.lane.b32.xlu0 %v343, 1
        %v466 = vpop.permute.xlu0 %465
        %467 = vrot.lane.b32.xlu0 %v344, 1
        %v468 = vpop.permute.xlu0 %467
        %v469 = vsel %vm456, %v466, %v468
        %v473 = vmul.f32 %v356, %v466
        %v474 = vmul.f32 %v357, %v469
        %v475 = vmul.f32 %v358, %v468
        %479 = vrot.lane.b32.xlu0 %v473, 127
        %v480 = vpop.permute.xlu0 %479
        %481 = vrot.lane.b32.xlu0 %v474, 127
        %v482 = vpop.permute.xlu0 %481
        %483 = vrot.lane.b32.xlu0 %v475, 127
        %v484 = vpop.permute.xlu0 %483
        %v485 = vsel %vm439, %v480, %v482
        %v486 = vsel %vm439, %v482, %v484
        %489 = vst [vmem:[#allocation4 + $0x50] sm:$0xff] %v485
        %490 = vst [vmem:[#allocation4 + $0x58] sm:$0xff] %v486
        %491 = vrot.lane.b32.xlu0 %v333, 15
        %v492 = vpop.permute.xlu0 %491
        %493 = vrot.lane.b32.xlu0 %v334, 15
        %v494 = vpop.permute.xlu0 %493
        %v495 = vsel %vm428, %v492, %v494
        %v499 = vmul.f32 %v356, %v492
        %v500 = vmul.f32 %v357, %v495
        %v501 = vmul.f32 %v358, %v494
        %505 = vrot.lane.b32.xlu0 %v499, 113
        %v506 = vpop.permute.xlu0 %505
        %507 = vrot.lane.b32.xlu0 %v500, 113
        %v508 = vpop.permute.xlu0 %507
        %509 = vrot.lane.b32.xlu0 %v501, 113
        %v510 = vpop.permute.xlu0 %509
        %v511 = vsel %vm411, %v506, %v508
        %v512 = vsel %vm411, %v508, %v510
        %515 = vst [vmem:[#allocation4 + $0x60] sm:$0xff] %v511
        %516 = vst [vmem:[#allocation4 + $0x68] sm:$0xff] %v512
        %518 = vrot.lane.b32.xlu0 %v356, 112
        %v519 = vpop.permute.xlu0 %518
        %520 = vrot.lane.b32.xlu0 %v357, 112
        %v521 = vpop.permute.xlu0 %520
        %522 = vrot.lane.b32.xlu0 %v358, 112
        %v523 = vpop.permute.xlu0 %522
        %vm524 = vcmask 916480
        %v525 = vsel %vm524, %v519, %v521
        %v526 = vsel %vm524, %v521, %v523
        %529 = vst [vmem:[#allocation4 + $0x70] sm:$0xff] %v525
        %530 = vst [vmem:[#allocation4 + $0x78] sm:$0xff] %v526
        %531 = vrot.lane.b32.xlu0 %v343, 17
        %v532 = vpop.permute.xlu0 %531
        %533 = vrot.lane.b32.xlu0 %v344, 17
        %v534 = vpop.permute.xlu0 %533
        %v535 = vsel %vm382, %v532, %v534
        %v539 = vmul.f32 %v356, %v532
        %v540 = vmul.f32 %v357, %v535
        %v541 = vmul.f32 %v358, %v534
        %545 = vrot.lane.b32.xlu0 %v539, 111
        %v546 = vpop.permute.xlu0 %545
        %547 = vrot.lane.b32.xlu0 %v540, 111
        %v548 = vpop.permute.xlu0 %547
        %549 = vrot.lane.b32.xlu0 %v541, 111
        %v550 = vpop.permute.xlu0 %549
        %v551 = vsel %vm365, %v546, %v548
        %v552 = vsel %vm365, %v548, %v550
        %555 = vst [vmem:[#allocation4 + $0x80] sm:$0xff] %v551
        %556 = vst [vmem:[#allocation4 + $0x88] sm:$0xff] %v552
        %v557 = vld [vmem:[#allocation2] sm:$0xff]
        %v558 = vld [vmem:[#allocation2 + $0x8] sm:$0xff]
        %v559 = vrot.slane %v334, 4
        %vm560 = vcmask 1043456
        %v561 = vsel %vm560, %v333, %v559
        %562 = vrot.lane.b32.xlu0 %v561, 111
        %v563 = vpop.permute.xlu0 %562
        %v564 = vrot.slane %v563, 4
        %v565 = vsel %vm365, %v564, %v563
        %v568 = vmul.f32 %v557, %v565
        %v569 = vmul.f32 %v558, %v564
        %572 = vst [vmem:[#allocation1] ss:$2 sm:$0xff] %v568
        %s573 = scalar_lea.vmem [#allocation1], 16
        %574 = vst [vmem:[%s573] ss:$2 sm:$0xff] %v569
        %v575 = vld.sshfl [vmem:[#allocation1] sm:$0xff pattern:$0x75316420]
        %v576 = vld.sshfl [vmem:[#allocation1 + $0x8] sm:$0xff pattern:$0x75316420]
        %v577 = vld.sshfl [vmem:[#allocation1 + $0x10] sm:$0xff pattern:$0x75316420]
        %578 = vrot.lane.b32.xlu0 %v575, 17
        %v579 = vpop.permute.xlu0 %578
        %580 = vrot.lane.b32.xlu0 %v576, 17
        %v581 = vpop.permute.xlu0 %580
        %582 = vrot.lane.b32.xlu0 %v577, 17
        %v583 = vpop.permute.xlu0 %582
        %v584 = vsel %vm382, %v579, %v581
        %v585 = vsel %vm382, %v581, %v583
        %588 = vst [vmem:[#allocation4 + $0x90] sm:$0xf] %v584
        %589 = vst [vmem:[#allocation4 + $0x98] sm:$0xf] %v585
        %s592 = scalar_lea.vmem [#allocation1], 1
        %593 = vst [vmem:[%s592] ss:$2 sm:$0xff] %v557
        %s594 = scalar_lea.vmem [#allocation1], 17
        %595 = vst [vmem:[%s594] ss:$2 sm:$0xff] %v558
        %v596 = vld.sshfl [vmem:[#allocation1] sm:$0xff pattern:$0x75316420]
        %v597 = vld.sshfl [vmem:[#allocation1 + $0x8] sm:$0xff pattern:$0x75316420]
        %v598 = vld.sshfl [vmem:[#allocation1 + $0x10] sm:$0xff pattern:$0x75316420]
        %599 = vrot.lane.b32.xlu0 %v596, 16
        %v600 = vpop.permute.xlu0 %599
        %601 = vrot.lane.b32.xlu0 %v597, 16
        %v602 = vpop.permute.xlu0 %601
        %603 = vrot.lane.b32.xlu0 %v598, 16
        %v604 = vpop.permute.xlu0 %603
        %v605 = vsel %vm398, %v600, %v602
        %v606 = vsel %vm398, %v602, %v604
        %609 = vst [vmem:[#allocation4 + $0x90] sm:$0xf0] %v605
        %610 = vst [vmem:[#allocation4 + $0x98] sm:$0xf0] %v606
        %v611 = vrot.slane %v344, 4
        %v612 = vsel %vm560, %v343, %v611
        %613 = vrot.lane.b32.xlu0 %v612, 113
        %v614 = vpop.permute.xlu0 %613
        %v615 = vrot.slane %v614, 4
        %v616 = vsel %vm411, %v615, %v614
        %v619 = vmul.f32 %v557, %v616
        %v620 = vmul.f32 %v558, %v615
        %623 = vst [vmem:[#allocation1] ss:$2 sm:$0xff] %v619
        %s624 = scalar_lea.vmem [#allocation1], 16
        %625 = vst [vmem:[%s624] ss:$2 sm:$0xff] %v620
        %v626 = vld.sshfl [vmem:[#allocation1] sm:$0xff pattern:$0x75316420]
        %v627 = vld.sshfl [vmem:[#allocation1 + $0x8] sm:$0xff pattern:$0x75316420]
        %v628 = vld.sshfl [vmem:[#allocation1 + $0x10] sm:$0xff pattern:$0x75316420]
        %629 = vrot.lane.b32.xlu0 %v626, 15
        %v630 = vpop.permute.xlu0 %629
        %631 = vrot.lane.b32.xlu0 %v627, 15
        %v632 = vpop.permute.xlu0 %631
        %633 = vrot.lane.b32.xlu0 %v628, 15
        %v634 = vpop.permute.xlu0 %633
        %v635 = vsel %vm428, %v630, %v632
        %v636 = vsel %vm428, %v632, %v634
        %639 = vst [vmem:[#allocation4 + $0xa0] sm:$0xf] %v635
        %640 = vst [vmem:[#allocation4 + $0xa8] sm:$0xf] %v636
        %641 = vrot.lane.b32.xlu0 %v561, 127
        %v642 = vpop.permute.xlu0 %641
        %v643 = vrot.slane %v642, 4
        %v644 = vsel %vm439, %v643, %v642
        %v647 = vmul.f32 %v557, %v644
        %v648 = vmul.f32 %v558, %v643
        %s651 = scalar_lea.vmem [#allocation1], 1
        %652 = vst [vmem:[%s651] ss:$2 sm:$0xff] %v647
        %s653 = scalar_lea.vmem [#allocation1], 17
        %654 = vst [vmem:[%s653] ss:$2 sm:$0xff] %v648
        %v655 = vld.sshfl [vmem:[#allocation1] sm:$0xff pattern:$0x75316420]
        %v656 = vld.sshfl [vmem:[#allocation1 + $0x8] sm:$0xff pattern:$0x75316420]
        %v657 = vld.sshfl [vmem:[#allocation1 + $0x10] sm:$0xff pattern:$0x75316420]
        %658 = vrot.lane.b32.xlu0 %v655, 1
        %v659 = vpop.permute.xlu0 %658
        %660 = vrot.lane.b32.xlu0 %v656, 1
        %v661 = vpop.permute.xlu0 %660
        %662 = vrot.lane.b32.xlu0 %v657, 1
        %v663 = vpop.permute.xlu0 %662
        %v664 = vsel %vm456, %v659, %v661
        %v665 = vsel %vm456, %v661, %v663
        %668 = vst [vmem:[#allocation4 + $0xa0] sm:$0xf0] %v664
        %669 = vst [vmem:[#allocation4 + $0xa8] sm:$0xf0] %v665
        %670 = vst [vmem:[#allocation1] ss:$2 sm:$0xff] %v557
        %s671 = scalar_lea.vmem [#allocation1], 16
        %672 = vst [vmem:[%s671] ss:$2 sm:$0xff] %v558
        %v673 = vld.sshfl [vmem:[#allocation1 + $0x8] sm:$0xff pattern:$0x75316420]
        %v674 = vld.sshfl [vmem:[#allocation1 + $0x10] sm:$0xff pattern:$0x75316420]
        %677 = vst [vmem:[#allocation4 + $0xb0] sm:$0xf] %v673
        %678 = vst [vmem:[#allocation4 + $0xb8] sm:$0xf] %v674
        %679 = vrot.lane.b32.xlu0 %v557, 127
        %v680 = vpop.permute.xlu0 %679
        %681 = vrot.lane.b32.xlu0 %v558, 127
        %v682 = vpop.permute.xlu0 %681
        %v683 = vrot.slane %v680, 4
        %v684 = vrot.slane %v682, 4
        %v685 = vsel %vm560, %v683, %v684
        %v686 = vsel %vm439, %v685, %v682
        %v689 = vmul.f32 %v686, %v612
        %s691 = scalar_lea.vmem [#allocation1], 1
        %692 = vst [vmem:[%s691] ss:$2 sm:$0xff] %v689
        %v693 = vld.sshfl [vmem:[#allocation1] sm:$0xff pattern:$0x75316420]
        %v694 = vld.sshfl [vmem:[#allocation1 + $0x8] sm:$0xff pattern:$0x75316420]
        %697 = vst [vmem:[#allocation4 + $0xb0] sm:$0xf0] %v693
        %698 = vst [vmem:[#allocation4 + $0xb8] sm:$0xf0] %v694
        %699 = vrot.lane.b32.xlu0 %v557, 113
        %v700 = vpop.permute.xlu0 %699
        %701 = vrot.lane.b32.xlu0 %v558, 113
        %v702 = vpop.permute.xlu0 %701
        %v703 = vrot.slane %v700, 4
        %v704 = vrot.slane %v702, 4
        %v705 = vsel %vm560, %v703, %v704
        %v706 = vsel %vm411, %v705, %v702
        %v709 = vmul.f32 %v706, %v561
        %711 = vst [vmem:[#allocation1] ss:$2 sm:$0xff] %v709
        %v712 = vld.sshfl [vmem:[#allocation1] sm:$0xff pattern:$0x75316420]
        %v713 = vld.sshfl [vmem:[#allocation1 + $0x8] sm:$0xff pattern:$0x75316420]
        %716 = vst [vmem:[#allocation4 + $0xc0] sm:$0xf] %v712
        %717 = vst [vmem:[#allocation4 + $0xc8] sm:$0xf] %v713
        %s718 = scalar_lea.vmem [#allocation1], 1
        %719 = vst [vmem:[%s718] ss:$2 sm:$0xff] %v557
        %s720 = scalar_lea.vmem [#allocation1], 17
        %721 = vst [vmem:[%s720] ss:$2 sm:$0xff] %v558
        %v722 = vld.sshfl [vmem:[#allocation1 + $0x8] sm:$0xff pattern:$0x75316420]
        %v723 = vld.sshfl [vmem:[#allocation1 + $0x10] sm:$0xff pattern:$0x75316420]
        %v724 = vld.sshfl [vmem:[#allocation1 + $0x18] sm:$0xff pattern:$0x75316420]
        %725 = vrot.lane.b32.xlu0 %v722, 112
        %v726 = vpop.permute.xlu0 %725
        %727 = vrot.lane.b32.xlu0 %v723, 112
        %v728 = vpop.permute.xlu0 %727
        %729 = vrot.lane.b32.xlu0 %v724, 112
        %v730 = vpop.permute.xlu0 %729
        %v731 = vsel %vm524, %v726, %v728
        %v732 = vsel %vm524, %v728, %v730
        %735 = vst [vmem:[#allocation4 + $0xc0] sm:$0xf0] %v731
        %736 = vst [vmem:[#allocation4 + $0xc8] sm:$0xf0] %v732
        %737 = vrot.lane.b32.xlu0 %v557, 111
        %v738 = vpop.permute.xlu0 %737
        %739 = vrot.lane.b32.xlu0 %v558, 111
        %v740 = vpop.permute.xlu0 %739
        %v741 = vrot.slane %v738, 4
        %v742 = vrot.slane %v740, 4
        %v743 = vsel %vm560, %v741, %v742
        %v744 = vsel %vm365, %v743, %v740
        %v746 = vmul.f32 %v744, %v612
        %748 = vst [vmem:[#allocation1] ss:$2 sm:$0xff] %v746
        %v749 = vld.sshfl [vmem:[#allocation1] sm:$0xff pattern:$0x75316420]
        %v750 = vld.sshfl [vmem:[#allocation1 + $0x8] sm:$0xff pattern:$0x75316420]
        %753 = vst [vmem:[#allocation4 + $0xd0] sm:$0xf] %v749
        %754 = vst [vmem:[#allocation4 + $0xd8] sm:$0xf] %v750
        %v755 = vld [vmem:[#allocation4] sm:$0xff]
        %v756 = vld [vmem:[#allocation4 + $0x8] sm:$0xff]
        %v757 = vld [vmem:[#allocation4 + $0x10] sm:$0xff]
        %v758 = vld [vmem:[#allocation4 + $0x18] sm:$0xff]
        %v759 = vld [vmem:[#allocation4 + $0x20] sm:$0xff]
        %v760 = vld [vmem:[#allocation4 + $0x28] sm:$0xff]
        %v761 = vld [vmem:[#allocation4 + $0x30] sm:$0xff]
        %v762 = vld [vmem:[#allocation4 + $0x38] sm:$0xff]
        %v763 = vld [vmem:[#allocation4 + $0x40] sm:$0xff]
        %v764 = vld [vmem:[#allocation4 + $0x48] sm:$0xff]
        %v765 = vld [vmem:[#allocation4 + $0x50] sm:$0xff]
        %v766 = vld [vmem:[#allocation4 + $0x58] sm:$0xff]
        %v767 = vld [vmem:[#allocation4 + $0x60] sm:$0xff]
        %v768 = vld [vmem:[#allocation4 + $0x68] sm:$0xff]
        %v769 = vld [vmem:[#allocation4 + $0x70] sm:$0xff]
        %v770 = vld [vmem:[#allocation4 + $0x78] sm:$0xff]
        %v771 = vld [vmem:[#allocation4 + $0x80] sm:$0xff]
        %v772 = vld [vmem:[#allocation4 + $0x88] sm:$0xff]
        %v773 = vld [vmem:[#allocation4 + $0x90] sm:$0xff]
        %v774 = vld [vmem:[#allocation4 + $0x98] sm:$0xff]
        %v775 = vld [vmem:[#allocation4 + $0xa0] sm:$0xff]
        %v776 = vld [vmem:[#allocation4 + $0xa8] sm:$0xff]
        %v777 = vld [vmem:[#allocation4 + $0xb0] sm:$0xff]
        %v778 = vld [vmem:[#allocation4 + $0xb8] sm:$0xff]
        %v779 = vld [vmem:[#allocation4 + $0xc0] sm:$0xff]
        %v780 = vld [vmem:[#allocation4 + $0xc8] sm:$0xff]
        %v781 = vld [vmem:[#allocation4 + $0xd0] sm:$0x1f]
        %v782 = vld [vmem:[#allocation4 + $0xd8] sm:$0x1f]
        %vm783 = vcmask 891904
        %v785 = vsel %vm783, %v345, 0
        %v788 = vsel %vm783, %v346, 0
        %v791 = vsel %vm783, %v347, 0
        %vm793 = vcmask 1044480
        %v795 = vsel %vm793, %v781, 0
        %v798 = vsel %vm793, %v782, 0
        %800 = vmatpush.msra.mxu0 0.0
        %801 = vmatpush.msra.mxu0 0.0
        %802 = vmatpush.msra.mxu0 %v795
        %803 = vmatpush.msra.mxu0 %v779
        %804 = vmatpush.msra.mxu0 %v777
        %805 = vmatpush.msra.mxu0 %v775
        %806 = vmatpush.msra.mxu0 %v773
        %807 = vmatpush.msra.mxu0 %v771
        %808 = vmatpush.msra.mxu0 %v769
        %809 = vmatpush.msra.mxu0 %v767
        %810 = vmatpush.msra.mxu0 %v765
        %811 = vmatpush.msra.mxu0 %v763
        %812 = vmatpush.msra.mxu0 %v761
        %813 = vmatpush.msra.mxu0 %v759
        %814 = vmatpush.msra.mxu0 %v757
        %815 = vmatpush.msra.mxu0 %v755
        %816 = vmatmul.f32.gmra.mxu0 %v785
        %v817 = vpop.f32.mrf.mxu0
        %v818 = vadd.f32 0.0, %v817
        %819 = vmatmul.f32.gmra.mxu0 %v788
        %v820 = vpop.f32.mrf.mxu0
        %v821 = vadd.f32 0.0, %v820
        %822 = vmatmul.f32.gmra.mxu0 %v791
        %v823 = vpop.f32.mrf.mxu0
        %v824 = vadd.f32 0.0, %v823
        %825 = vdwg.mxu0
        %826 = vmatpush.msra.mxu0 0.0
        %827 = vmatpush.msra.mxu0 0.0
        %828 = vmatpush.msra.mxu0 %v798
        %829 = vmatpush.msra.mxu0 %v780
        %830 = vmatpush.msra.mxu0 %v778
        %831 = vmatpush.msra.mxu0 %v776
        %832 = vmatpush.msra.mxu0 %v774
        %833 = vmatpush.msra.mxu0 %v772
        %834 = vmatpush.msra.mxu0 %v770
        %835 = vmatpush.msra.mxu0 %v768
        %836 = vmatpush.msra.mxu0 %v766
        %837 = vmatpush.msra.mxu0 %v764
        %838 = vmatpush.msra.mxu0 %v762
        %839 = vmatpush.msra.mxu0 %v760
        %840 = vmatpush.msra.mxu0 %v758
        %841 = vmatpush.msra.mxu0 %v756
        %842 = vmatmul.f32.gmra.mxu0 %v785
        %v843 = vpop.f32.mrf.mxu0
        %v844 = vadd.f32 0.0, %v843
        %845 = vmatmul.f32.gmra.mxu0 %v788
        %v846 = vpop.f32.mrf.mxu0
        %v847 = vadd.f32 0.0, %v846
        %848 = vmatmul.f32.gmra.mxu0 %v791
        %v849 = vpop.f32.mrf.mxu0
        %v850 = vadd.f32 0.0, %v849
        %851 = vdwg.mxu0
        %v852 = vxor.u32 %v818, 2147483648
        %v853 = vxor.u32 %v844, 2147483648
        %v854 = vmul.f32 %v852, 1.442695
        %v855 = vpow.pop %v854
        %v856 = vmul.f32 %v853, 1.442695
        %v857 = vpow.pop %v856
        %v858 = vadd.f32 %v855, 1.0
        %v859 = vadd.f32 %v857, 1.0
        %v860 = vrcp.pop %v858
        %v861 = vmul.f32 %v858, %v860
        %v862 = vsub.f32 1.0, %v861
        %v863 = vmul.f32 %v860, %v862
        %v864 = vadd.f32 %v860, %v863
        %vm865 = vweird.f32 %v858
        %vm866 = vweird.f32 %v860
        %vm867 = vmor %vm865, %vm866
        %v868 = vsel %vm867, %v860, %v864
        %v869 = vand.u32 2147483647, %v858
        %vm870 = vcmp.eq.f32.partialorder %v869, 8.507059e+37
        %v871 = vand.u32 %v858, 2147483648
        %v872 = vor.u32 1.1754944e-38, %v871
        %v873 = vsel %vm870, %v872, %v868
        %v874 = vmul.f32 1.0, %v873
        %v875 = vrcp.pop %v859
        %v876 = vmul.f32 %v859, %v875
        %v877 = vsub.f32 1.0, %v876
        %v878 = vmul.f32 %v875, %v877
        %v879 = vadd.f32 %v875, %v878
        %vm880 = vweird.f32 %v859
        %vm881 = vweird.f32 %v875
        %vm882 = vmor %vm880, %vm881
        %v883 = vsel %vm882, %v875, %v879
        %v884 = vand.u32 2147483647, %v859
        %vm885 = vcmp.eq.f32.partialorder %v884, 8.507059e+37
        %v886 = vand.u32 %v859, 2147483648
        %v887 = vor.u32 1.1754944e-38, %v886
        %v888 = vsel %vm885, %v887, %v883
        %v889 = vmul.f32 1.0, %v888
        %v890 = vxor.u32 %v821, 2147483648
        %v891 = vxor.u32 %v847, 2147483648
        %v892 = vmul.f32 %v890, 1.442695
        %v893 = vpow.pop %v892
        %v894 = vmul.f32 %v891, 1.442695
        %v895 = vpow.pop %v894
        %v896 = vadd.f32 %v893, 1.0
        %v897 = vadd.f32 %v895, 1.0
        %v898 = vrcp.pop %v896
        %v899 = vmul.f32 %v896, %v898
        %v900 = vsub.f32 1.0, %v899
        %v901 = vmul.f32 %v898, %v900
        %v902 = vadd.f32 %v898, %v901
        %vm903 = vweird.f32 %v896
        %vm904 = vweird.f32 %v898
        %vm905 = vmor %vm903, %vm904
        %v906 = vsel %vm905, %v898, %v902
        %v907 = vand.u32 2147483647, %v896
        %vm908 = vcmp.eq.f32.partialorder %v907, 8.507059e+37
        %v909 = vand.u32 %v896, 2147483648
        %v910 = vor.u32 1.1754944e-38, %v909
        %v911 = vsel %vm908, %v910, %v906
        %v912 = vmul.f32 1.0, %v911
        %v913 = vrcp.pop %v897
        %v914 = vmul.f32 %v897, %v913
        %v915 = vsub.f32 1.0, %v914
        %v916 = vmul.f32 %v913, %v915
        %v917 = vadd.f32 %v913, %v916
        %vm918 = vweird.f32 %v897
        %vm919 = vweird.f32 %v913
        %vm920 = vmor %vm918, %vm919
        %v921 = vsel %vm920, %v913, %v917
        %v922 = vand.u32 2147483647, %v897
        %vm923 = vcmp.eq.f32.partialorder %v922, 8.507059e+37
        %v924 = vand.u32 %v897, 2147483648
        %v925 = vor.u32 1.1754944e-38, %v924
        %v926 = vsel %vm923, %v925, %v921
        %v927 = vmul.f32 1.0, %v926
        %v928 = vmul.f32 %v350, %v912
        %v929 = vmul.f32 %v351, %v927
        %930 = vst [vmem:[#allocation3 + $0x8] sm:$0xff] %v928
        %931 = vst [vmem:[#allocation3 + $0x10] sm:$0xff] %v929
        %v932 = vld [vmem:[#allocation3] sm:$0xff]
        %v933 = vld [vmem:[#allocation3 + $0x8] sm:$0xff]
        %v934 = vld [vmem:[#allocation3 + $0x10] sm:$0xff]
        %v935 = vld [vmem:[#allocation3 + $0x18] sm:$0xff]
        %v936 = vmul.f32 %v932, %v362
        %v937 = vmul.f32 %v933, %v366
        %v938 = vmul.f32 %v934, %v364
        %942 = vrot.lane.b32.xlu0 %v936, 17
        %v943 = vpop.permute.xlu0 %942
        %944 = vrot.lane.b32.xlu0 %v937, 17
        %v945 = vpop.permute.xlu0 %944
        %946 = vrot.lane.b32.xlu0 %v938, 17
        %v947 = vpop.permute.xlu0 %946
        %v948 = vsel %vm382, %v943, %v945
        %v949 = vsel %vm382, %v945, %v947
        %952 = vst [vmem:[#allocation4] sm:$0xff] %v948
        %953 = vst [vmem:[#allocation4 + $0x8] sm:$0xff] %v949
        %957 = vrot.lane.b32.xlu0 %v932, 16
        %v958 = vpop.permute.xlu0 %957
        %959 = vrot.lane.b32.xlu0 %v933, 16
        %v960 = vpop.permute.xlu0 %959
        %961 = vrot.lane.b32.xlu0 %v934, 16
        %v962 = vpop.permute.xlu0 %961
        %v963 = vsel %vm398, %v958, %v960
        %v964 = vsel %vm398, %v960, %v962
        %967 = vst [vmem:[#allocation4 + $0x10] sm:$0xff] %v963
        %968 = vst [vmem:[#allocation4 + $0x18] sm:$0xff] %v964
        %v969 = vmul.f32 %v932, %v408
        %v970 = vmul.f32 %v933, %v412
        %v971 = vmul.f32 %v934, %v410
        %975 = vrot.lane.b32.xlu0 %v969, 15
        %v976 = vpop.permute.xlu0 %975
        %977 = vrot.lane.b32.xlu0 %v970, 15
        %v978 = vpop.permute.xlu0 %977
        %979 = vrot.lane.b32.xlu0 %v971, 15
        %v980 = vpop.permute.xlu0 %979
        %v981 = vsel %vm428, %v976, %v978
        %v982 = vsel %vm428, %v978, %v980
        %985 = vst [vmem:[#allocation4 + $0x20] sm:$0xff] %v981
        %986 = vst [vmem:[#allocation4 + $0x28] sm:$0xff] %v982
        %v987 = vmul.f32 %v932, %v436
        %v988 = vmul.f32 %v933, %v440
        %v989 = vmul.f32 %v934, %v438
        %993 = vrot.lane.b32.xlu0 %v987, 1
        %v994 = vpop.permute.xlu0 %993
        %995 = vrot.lane.b32.xlu0 %v988, 1
        %v996 = vpop.permute.xlu0 %995
        %997 = vrot.lane.b32.xlu0 %v989, 1
        %v998 = vpop.permute.xlu0 %997
        %v999 = vsel %vm456, %v994, %v996
        %v1000 = vsel %vm456, %v996, %v998
        %1003 = vst [vmem:[#allocation4 + $0x30] sm:$0xff] %v999
        %1004 = vst [vmem:[#allocation4 + $0x38] sm:$0xff] %v1000
        %1005 = vst [vmem:[#allocation4 + $0x40] sm:$0xff] %v933
        %1006 = vst [vmem:[#allocation4 + $0x48] sm:$0xff] %v934
        %v1007 = vmul.f32 %v933, %v466
        %v1008 = vmul.f32 %v934, %v469
        %v1009 = vmul.f32 %v935, %v468
        %1013 = vrot.lane.b32.xlu0 %v1007, 127
        %v1014 = vpop.permute.xlu0 %1013
        %1015 = vrot.lane.b32.xlu0 %v1008, 127
        %v1016 = vpop.permute.xlu0 %1015
        %1017 = vrot.lane.b32.xlu0 %v1009, 127
        %v1018 = vpop.permute.xlu0 %1017
        %v1019 = vsel %vm439, %v1014, %v1016
        %v1020 = vsel %vm439, %v1016, %v1018
        %1023 = vst [vmem:[#allocation4 + $0x50] sm:$0xff] %v1019
        %1024 = vst [vmem:[#allocation4 + $0x58] sm:$0xff] %v1020
        %v1025 = vmul.f32 %v933, %v492
        %v1026 = vmul.f32 %v934, %v495
        %v1027 = vmul.f32 %v935, %v494
        %1031 = vrot.lane.b32.xlu0 %v1025, 113
        %v1032 = vpop.permute.xlu0 %1031
        %1033 = vrot.lane.b32.xlu0 %v1026, 113
        %v1034 = vpop.permute.xlu0 %1033
        %1035 = vrot.lane.b32.xlu0 %v1027, 113
        %v1036 = vpop.permute.xlu0 %1035
        %v1037 = vsel %vm411, %v1032, %v1034
        %v1038 = vsel %vm411, %v1034, %v1036
        %1041 = vst [vmem:[#allocation4 + $0x60] sm:$0xff] %v1037
        %1042 = vst [vmem:[#allocation4 + $0x68] sm:$0xff] %v1038
        %1044 = vrot.lane.b32.xlu0 %v933, 112
        %v1045 = vpop.permute.xlu0 %1044
        %1046 = vrot.lane.b32.xlu0 %v934, 112
        %v1047 = vpop.permute.xlu0 %1046
        %1048 = vrot.lane.b32.xlu0 %v935, 112
        %v1049 = vpop.permute.xlu0 %1048
        %v1050 = vsel %vm524, %v1045, %v1047
        %v1051 = vsel %vm524, %v1047, %v1049
        %1054 = vst [vmem:[#allocation4 + $0x70] sm:$0xff] %v1050
        %1055 = vst [vmem:[#allocation4 + $0x78] sm:$0xff] %v1051
        %v1056 = vmul.f32 %v933, %v532
        %v1057 = vmul.f32 %v934, %v535
        %v1058 = vmul.f32 %v935, %v534
        %1062 = vrot.lane.b32.xlu0 %v1056, 111
        %v1063 = vpop.permute.xlu0 %1062
        %1064 = vrot.lane.b32.xlu0 %v1057, 111
        %v1065 = vpop.permute.xlu0 %1064
        %1066 = vrot.lane.b32.xlu0 %v1058, 111
        %v1067 = vpop.permute.xlu0 %1066
        %v1068 = vsel %vm365, %v1063, %v1065
        %v1069 = vsel %vm365, %v1065, %v1067
        %1072 = vst [vmem:[#allocation4 + $0x80] sm:$0xff] %v1068
        %1073 = vst [vmem:[#allocation4 + $0x88] sm:$0xff] %v1069
        %v1074 = vld [vmem:[#allocation4] sm:$0xff]
        %v1075 = vld [vmem:[#allocation4 + $0x8] sm:$0xff]
        %v1076 = vld [vmem:[#allocation4 + $0x10] sm:$0xff]
        %v1077 = vld [vmem:[#allocation4 + $0x18] sm:$0xff]
        %v1078 = vld [vmem:[#allocation4 + $0x20] sm:$0xff]
        %v1079 = vld [vmem:[#allocation4 + $0x28] sm:$0xff]
        %v1080 = vld [vmem:[#allocation4 + $0x30] sm:$0xff]
        %v1081 = vld [vmem:[#allocation4 + $0x38] sm:$0xff]
        %v1082 = vld [vmem:[#allocation4 + $0x40] sm:$0xff]
        %v1083 = vld [vmem:[#allocation4 + $0x48] sm:$0xff]
        %v1084 = vld [vmem:[#allocation4 + $0x50] sm:$0xff]
        %v1085 = vld [vmem:[#allocation4 + $0x58] sm:$0xff]
        %v1086 = vld [vmem:[#allocation4 + $0x60] sm:$0xff]
        %v1087 = vld [vmem:[#allocation4 + $0x68] sm:$0xff]
        %v1088 = vld [vmem:[#allocation4 + $0x70] sm:$0xff]
        %v1089 = vld [vmem:[#allocation4 + $0x78] sm:$0xff]
        %v1090 = vld [vmem:[#allocation4 + $0x80] sm:$0xff]
        %v1091 = vld [vmem:[#allocation4 + $0x88] sm:$0xff]
        %vm1092 = vcmask 588800
        %v1094 = vsel %vm1092, %v348, 0
        %1096 = vmatpush.msra.mxu0 0.0
        %1097 = vmatpush.msra.mxu0 0.0
        %1098 = vmatpush.msra.mxu0 0.0
        %1099 = vmatpush.msra.mxu0 0.0
        %1100 = vmatpush.msra.mxu0 0.0
        %1101 = vmatpush.msra.mxu0 0.0
        %1102 = vmatpush.msra.mxu0 0.0
        %1103 = vmatpush.msra.mxu0 %v1090
        %1104 = vmatpush.msra.mxu0 %v1088
        %1105 = vmatpush.msra.mxu0 %v1086
        %1106 = vmatpush.msra.mxu0 %v1084
        %1107 = vmatpush.msra.mxu0 %v1082
        %1108 = vmatpush.msra.mxu0 %v1080
        %1109 = vmatpush.msra.mxu0 %v1078
        %1110 = vmatpush.msra.mxu0 %v1076
        %1111 = vmatpush.msra.mxu0 %v1074
        %1112 = vmatmul.f32.gmra.mxu0 %v1094
        %v1113 = vpop.f32.mrf.mxu0
        %v1114 = vadd.f32 0.0, %v1113
        %1115 = vdwg.mxu0
        %1116 = vmatpush.msra.mxu0 0.0
        %1117 = vmatpush.msra.mxu0 0.0
        %1118 = vmatpush.msra.mxu0 0.0
        %1119 = vmatpush.msra.mxu0 0.0
        %1120 = vmatpush.msra.mxu0 0.0
        %1121 = vmatpush.msra.mxu0 0.0
        %1122 = vmatpush.msra.mxu0 0.0
        %1123 = vmatpush.msra.mxu0 %v1091
        %1124 = vmatpush.msra.mxu0 %v1089
        %1125 = vmatpush.msra.mxu0 %v1087
        %1126 = vmatpush.msra.mxu0 %v1085
        %1127 = vmatpush.msra.mxu0 %v1083
        %1128 = vmatpush.msra.mxu0 %v1081
        %1129 = vmatpush.msra.mxu0 %v1079
        %1130 = vmatpush.msra.mxu0 %v1077
        %1131 = vmatpush.msra.mxu0 %v1075
        %1132 = vmatmul.f32.gmra.mxu0 %v1094
        %v1133 = vpop.f32.mrf.mxu0
        %v1134 = vadd.f32 0.0, %v1133
        %1135 = vdwg.mxu0
        %v1136 = vadd.f32 %v824, %v1114
        %v1137 = vadd.f32 %v850, %v1134
        %v1138 = vtanh.pop %v1136
        %v1139 = vtanh.pop %v1137
        %v1140 = vsub.f32 1.0, %v874
        %v1141 = vsub.f32 1.0, %v889
        %v1142 = vmul.f32 %v350, %v1140
        %v1143 = vmul.f32 %v351, %v1141
        %v1144 = vmul.f32 %v1138, %v874
        %v1145 = vmul.f32 %v1139, %v889
        %v1146 = vadd.f32 %v1142, %v1144
        %v1147 = vadd.f32 %v1143, %v1145
        %1148 = vst [vmem:[%s286] sm:$0xff] %v1146
        %1149 = vst [vmem:[%s286 + $0x8] sm:$0xff] %v1147
        %s1150 = sand.u32 %s127, 1
        %s1151 = scalar_lea.sflag [#allocation7], %s1150
        %s1152 = sand.u32 %s127, 1
        %s1153 = smul.addr %s1152, 16
        %s1154 = scalar_lea.vmem [#allocation13], %s1153
        // Predicated region
        $region53: #{tpu_custom_call.1} parent=35 // pred_check
          %p1155 = pneg %p137
        $region54: #{tpu_custom_call.1} parent=35 // pred_check_branch
          %1157 = sbr.rel (%p1155) target = $region56
        $region55: #{tpu_custom_call.1} parent=35 // pred_region
          %1159 = vsyncadd %s1151, 0
          %s1160 = smul.addr %s25, 2
          %s1161 = smul.addr %s1160, 8
          %s1162 = scalar_lea.hbm %s4, %s1161
          %s1164 = sshll.u32 %s1154, 4
          %s1165 = int_to_ptr.vmem [resolvable:$true] %s1164
          %s1166 = sshll.u32 %s1162, 4
          %s1167 = int_to_ptr.hbm [resolvable:$true] %s1166
          %1169 = dma.vmem_to_hbm [thread:$0]  %s1165, 256, %s1167, %s1151
        $region56: #{tpu_custom_call.1} parent=35 // pred_fallthru
          _
      $region36: #{tpu_custom_call.1} parent=5 // pred_fallthru
        _
      %p1170 = scmp.le.s32.totalorder 2, %s20
      // Predicated region
      $region57: #{tpu_custom_call.1} parent=5 // pred_check
        %p1171 = pneg %p1170
      $region58: #{tpu_custom_call.1} parent=5 // pred_check_branch
        %1173 = sbr.rel (%p1171) target = $region60
      $region59: #{tpu_custom_call.1} parent=5 // pred_region
        %s1174 = ssub.s32 %s20, 2
        // Predicated region
        $region61: #{tpu_custom_call.1} parent=59 // pred_check
          %p1175 = pneg %p143
        $region62: #{tpu_custom_call.1} parent=59 // pred_check_branch
          %1177 = sbr.rel (%p1175) target = $region64
        $region63: #{tpu_custom_call.1} parent=59 // pred_region
          %s1178 = sand.u32 %s128, 1
          %s1179 = scalar_lea.sflag [#allocation7], %s1178
          %s1180 = sand.u32 %s128, 1
          %s1181 = smul.addr %s1180, 16
          %s1182 = scalar_lea.vmem [#allocation13], %s1181
          %1184 = dma.done %s1179, 256
        $region64: #{tpu_custom_call.1} parent=59 // pred_fallthru
          _
      $region60: #{tpu_custom_call.1} parent=5 // pred_fallthru
        _
    $region6: #{tpu_custom_call.1} parent=1 // loop_footer
      %s24 = sadd.s32 1, %s20
    $region7: #{tpu_custom_call.1} parent=1 // loop_footer_branch
      %19 = sbr.rel target = $region3
    $region8: #{tpu_custom_call.1} parent=1 // loop_exit
      _
    %1185 = vsyncpa [#allocation6], 1
    %s1186 = scalar_lea.sflag [#allocation6], 1
    %1187 = vsyncpa %s1186, 1
    %1188 = vsyncpa [#allocation9], 1
    %s1189 = scalar_lea.sflag [#allocation9], 1
    %1190 = vsyncpa %s1189, 1
    %1191 = vsyncpa [#allocation12], 1
    %1192 = vsyncpa [#allocation7], 1
    %s1193 = scalar_lea.sflag [#allocation7], 1
    %1194 = vsyncpa %s1193, 1

</llo_original>
